<compile_context>
chip_gen: v7x
topology: tpu7x:2x2x1
jax: 0.10.0
libtpu: 0.0.40
codegen_flags: <defaults>
</compile_context>

<pallas_src>
import numpy as np

import jax
import jax.numpy as jnp
from jax import lax
from jax.experimental import pallas as pl
from jax.experimental.pallas import tpu as pltpu


def _shift_deltas(C):
    # lane shift delta = (act_col - out_col) * C + (ci - co); with reflect
    # padding act_col - out_col stays in {-1, 0, 1}, ci, co in [0, C).
    return list(range(-(2 * C - 1), 2 * C))


def _make_fused_basic_block_kernel(H, C, LANES):
    """Fused conv1->bn1->relu->conv2->bn2->(+x)->relu on one lane-packed tile."""
    deltas = _shift_deltas(C)

    def lane_shift(v, d):
        # out[:, L] = v[:, (L + d) % LANES]; wrapped / cross-image lanes are
        # always multiplied by zero mask entries, so circular rotation is safe.
        if d == 0:
            return v
        return pltpu.roll(v, (-d) % LANES, axis=1)

    def kernel(x_ref, m1_ref, sh1_ref, m2_ref, sh2_ref, o_ref):
        x = x_ref[0].astype(jnp.float32)                       # (H, LANES)

        def conv_bn(act, m_ref, acc):
            # Vertical reflect bands: row above / row itself / row below
            # (row -1 -> row 1, row H -> row H-2), built in registers.
            up = jnp.concatenate([act[1:2, :], act[:H - 1, :]], axis=0)
            down = jnp.concatenate([act[1:, :], act[H - 2:H - 1, :]], axis=0)
            k = 0
            for band in (up, act, down):                       # dy = 0, 1, 2
                for d in deltas:
                    acc = acc + lane_shift(band, d) * m_ref[k:k + 1, :]
                    k += 1
            return acc

        # stage 1: conv1 -> bn1 -> relu  (BN scale folded into m1, shift = init)
        y = jnp.maximum(conv_bn(x, m1_ref, sh1_ref[...]), 0.0)

        # stage 2: conv2 -> bn2 -> + residual -> relu (shift + x fold into init)
        z = conv_bn(y, m2_ref, x + sh2_ref[...])
        o_ref[0] = jnp.maximum(z, 0.0).astype(o_ref.dtype)

    return kernel


def _fold_bn(gamma, beta, mean, var, eps=1e-5):
    scale = gamma / jnp.sqrt(var + eps)
    shift = beta - mean * scale
    return scale, shift


def _build_shift_masks(w_oihw, scale, W, npack):
    """Per-(dy, lane-shift) weight masks for the lane-packed (H, npack*W*C) conv.

    Horizontal reflect padding is folded in (boundary columns move their
    dx=0 / dx=2 tap weight onto the shift that reads the reflected column),
    and the folded-BN per-channel scale is multiplied in.

    w_oihw: (Cout, Cin, 3, 3) PyTorch-layout conv weight (Cout == Cin == C).
    Returns (3 * (4C-1), npack * W * C) float32; row = dy * (4C-1) + shift_idx,
    lane = img * W * C + x * C + co.
    """
    C = w_oihw.shape[0]
    deltas = _shift_deltas(C)
    nshift = len(deltas)
    didx = {d: j for j, d in enumerate(deltas)}

    # sel[j, x, co, dx, ci] = 1 iff the (dx, ci) tap of output column x /
    # channel co reads lane (x*C + co) + deltas[j] after horizontal reflect.
    sel = np.zeros((nshift, W, C, 3, C), np.float32)
    for x in range(W):
        for dx in range(3):
            px = x + dx                                  # padded column index
            a = 1 if px == 0 else (W - 2 if px == W + 1 else px - 1)
            for co in range(C):
                for ci in range(C):
                    d = (a - x) * C + ci - co
                    sel[didx[d], x, co, dx, ci] += 1.0

    w9 = jnp.transpose(w_oihw, (2, 3, 1, 0))             # (dy, dx, ci, co)
    masks = jnp.einsum('jxodi,ydio->yjxo', jnp.asarray(sel), w9)  # (3,ns,W,C)
    masks = masks * scale[None, None, None, :]           # fold BN scale
    masks = masks.reshape(3, nshift, W * C)
    masks = jnp.tile(masks, (1, 1, npack))               # same weights per image
    return masks.reshape(3 * nshift, npack * W * C)


@jax.jit
def basic_block_forward(x, params):
    """x: (N, H, W, C) NHWC float32 (the PyTorch module is NCHW; convert once
    at the model boundary).  params: PyTorch-layout conv weights + BN stats."""
    N, H, W, C = x.shape
    npack = 2 if (N % 2 == 0) else 1          # images packed along the lane dim
    L = npack * W * C                         # 2*16*4 = 128 -> full vregs
    nshift = 4 * C - 1

    sc1, sh1 = _fold_bn(params["g1"], params["b1"], params["m1"], params["v1"])
    sc2, sh2 = _fold_bn(params["g2"], params["b2"], params["m2"], params["v2"])

    m1 = _build_shift_masks(params["w1"], sc1, W, npack)   # (3*nshift, L)
    m2 = _build_shift_masks(params["w2"], sc2, W, npack)
    sh1_t = jnp.tile(sh1, W * npack).reshape(1, L)
    sh2_t = jnp.tile(sh2, W * npack).reshape(1, L)

    # Lane-dense packing: lane = img * W * C + x * C + c   (layout plumbing).
    xp = (x.reshape(N // npack, npack, H, W * C)
           .transpose(0, 2, 1, 3)
           .reshape(N // npack, H, L))

    out = pl.pallas_call(
        _make_fused_basic_block_kernel(H, C, L),
        out_shape=jax.ShapeDtypeStruct((N // npack, H, L), x.dtype),
        grid=(N // npack,),
        in_specs=[
            pl.BlockSpec((1, H, L), lambda n: (n, 0, 0)),        # packed x
            pl.BlockSpec((3 * nshift, L), lambda n: (0, 0)),     # masks1
            pl.BlockSpec((1, L), lambda n: (0, 0)),              # shift1
            pl.BlockSpec((3 * nshift, L), lambda n: (0, 0)),     # masks2
            pl.BlockSpec((1, L), lambda n: (0, 0)),              # shift2
        ],
        out_specs=pl.BlockSpec((1, H, L), lambda n: (n, 0, 0)),
        compiler_params=pltpu.CompilerParams(
            dimension_semantics=("parallel",)),
    )(xp, m1, sh1_t, m2, sh2_t)

    # Unpack back to (N, H, W, C).
    return (out.reshape(N // npack, H, npack, W, C)
               .transpose(0, 2, 1, 3, 4)
               .reshape(N, H, W, C))


def _reference_forward(x, params):
    """Pure-JAX reference (XLA convs, reflect pad) for correctness check."""
    def conv(inp, w_oihw):
        w_hwio = jnp.transpose(w_oihw, (2, 3, 1, 0))
        inp_p = jnp.pad(inp, ((0, 0), (1, 1), (1, 1), (0, 0)), mode="reflect")
        return lax.conv_general_dilated(
            inp_p, w_hwio, window_strides=(1, 1), padding="VALID",
            dimension_numbers=("NHWC", "HWIO", "NHWC"))

    sc1, sh1 = _fold_bn(params["g1"], params["b1"], params["m1"], params["v1"])
    sc2, sh2 = _fold_bn(params["g2"], params["b2"], params["m2"], params["v2"])
    out = jnp.maximum(conv(x, params["w1"]) * sc1 + sh1, 0.0)
    out = conv(out, params["w2"]) * sc2 + sh2
    return jnp.maximum(out + x, 0.0)


if __name__ == "__main__":
    key = jax.random.PRNGKey(0)
    N, H, W, C = 2, 16, 16, 4          # inplanes = planes = 4, stride = 1
    ks = jax.random.split(key, 11)

    x = jax.random.normal(ks[0], (N, H, W, C), jnp.float32)

    params = {
        # conv weights in PyTorch layout (Cout, Cin, 3, 3)
        "w1": 0.2 * jax.random.normal(ks[1], (C, C, 3, 3), jnp.float32),
        "w2": 0.2 * jax.random.normal(ks[2], (C, C, 3, 3), jnp.float32),
        # eval-mode BatchNorm synthetic stats
        "g1": 1.0 + 0.1 * jax.random.normal(ks[3], (C,), jnp.float32),
        "b1": 0.1 * jax.random.normal(ks[4], (C,), jnp.float32),
        "m1": 0.1 * jax.random.normal(ks[5], (C,), jnp.float32),
        "v1": 0.5 + jax.random.uniform(ks[6], (C,), jnp.float32),
        "g2": 1.0 + 0.1 * jax.random.normal(ks[7], (C,), jnp.float32),
        "b2": 0.1 * jax.random.normal(ks[8], (C,), jnp.float32),
        "m2": 0.1 * jax.random.normal(ks[9], (C,), jnp.float32),
        "v2": 0.5 + jax.random.uniform(ks[10], (C,), jnp.float32),
    }

    out = jax.block_until_ready(basic_block_forward(x, params))
    ref = _reference_forward(x, params)

    assert out.shape == (N, H, W, C)
    assert jnp.allclose(out, ref, atol=1e-4, rtol=1e-4), "mismatch vs reference"

    print("KERNEL_OK")
</pallas_src>

<mosaic_0001>
module attributes {stable_mosaic.version = 11 : i64} {
  func.func @kernel(%arg0: i32, %arg1: memref<1x16x128xf32, #tpu.memory_space<vmem>>, %arg2: memref<45x128xf32, #tpu.memory_space<vmem>>, %arg3: memref<1x128xf32, #tpu.memory_space<vmem>>, %arg4: memref<45x128xf32, #tpu.memory_space<vmem>>, %arg5: memref<1x128xf32, #tpu.memory_space<vmem>>, %arg6: memref<1x16x128xf32, #tpu.memory_space<vmem>>) attributes {dimension_semantics = [#tpu.dimension_semantics<parallel>], iteration_bounds = array<i64: 1>, scalar_prefetch = 0 : i64, scratch_operands = 0 : i64, tpu.core_type = #tpu.core_type<tc>, window_params = [{transform_indices = @transform_0, window_bounds = array<i64: 1, 16, 128>}, {pipeline_mode = #tpu.pipeline_mode<synchronous>, transform_indices = @transform_1, window_bounds = array<i64: 45, 128>}, {pipeline_mode = #tpu.pipeline_mode<synchronous>, transform_indices = @transform_2, window_bounds = array<i64: 1, 128>}, {pipeline_mode = #tpu.pipeline_mode<synchronous>, transform_indices = @transform_3, window_bounds = array<i64: 45, 128>}, {pipeline_mode = #tpu.pipeline_mode<synchronous>, transform_indices = @transform_4, window_bounds = array<i64: 1, 128>}, {transform_indices = @transform_5, window_bounds = array<i64: 1, 16, 128>}]} {
    %c0 = arith.constant 0 : index
    %c0_0 = arith.constant 0 : index
    %c0_1 = arith.constant 0 : index
    %0 = vector.load %arg1[%c0, %c0_0, %c0_1] : memref<1x16x128xf32, #tpu.memory_space<vmem>>, vector<1x16x128xf32>
    %1 = vector.shape_cast %0 : vector<1x16x128xf32> to vector<16x128xf32>
    %c0_2 = arith.constant 0 : index
    %c0_3 = arith.constant 0 : index
    %2 = vector.load %arg3[%c0_2, %c0_3] : memref<1x128xf32, #tpu.memory_space<vmem>>, vector<1x128xf32>
    %3 = vector.extract_strided_slice %1 {offsets = [1, 0], sizes = [1, 128], strides = [1, 1]} : vector<16x128xf32> to vector<1x128xf32>
    %4 = vector.extract_strided_slice %1 {offsets = [0, 0], sizes = [15, 128], strides = [1, 1]} : vector<16x128xf32> to vector<15x128xf32>
    %5 = tpu.concatenate %3, %4 in 0 : vector<1x128xf32>, vector<15x128xf32> -> vector<16x128xf32>
    %6 = vector.extract_strided_slice %1 {offsets = [1, 0], sizes = [15, 128], strides = [1, 1]} : vector<16x128xf32> to vector<15x128xf32>
    %7 = vector.extract_strided_slice %1 {offsets = [14, 0], sizes = [1, 128], strides = [1, 1]} : vector<16x128xf32> to vector<1x128xf32>
    %8 = tpu.concatenate %6, %7 in 0 : vector<15x128xf32>, vector<1x128xf32> -> vector<16x128xf32>
    %c7_i32 = arith.constant 7 : i32
    %9 = tpu.dynamic_rotate %5 by %c7_i32 dim 1 : vector<16x128xf32>, i32 -> vector<16x128xf32>
    %c0_4 = arith.constant 0 : index
    %c0_5 = arith.constant 0 : index
    %10 = vector.load %arg2[%c0_4, %c0_5] : memref<45x128xf32, #tpu.memory_space<vmem>>, vector<1x128xf32>
    %11 = vector.broadcast %10 : vector<1x128xf32> to vector<16x128xf32>
    %12 = arith.mulf %9, %11 : vector<16x128xf32>
    %13 = vector.broadcast %2 : vector<1x128xf32> to vector<16x128xf32>
    %14 = arith.addf %13, %12 : vector<16x128xf32>
    %c6_i32 = arith.constant 6 : i32
    %15 = tpu.dynamic_rotate %5 by %c6_i32 dim 1 : vector<16x128xf32>, i32 -> vector<16x128xf32>
    %c1 = arith.constant 1 : index
    %c0_6 = arith.constant 0 : index
    %16 = vector.load %arg2[%c1, %c0_6] : memref<45x128xf32, #tpu.memory_space<vmem>>, vector<1x128xf32>
    %17 = vector.broadcast %16 : vector<1x128xf32> to vector<16x128xf32>
    %18 = arith.mulf %15, %17 : vector<16x128xf32>
    %19 = arith.addf %14, %18 : vector<16x128xf32>
    %c5_i32 = arith.constant 5 : i32
    %20 = tpu.dynamic_rotate %5 by %c5_i32 dim 1 : vector<16x128xf32>, i32 -> vector<16x128xf32>
    %c2 = arith.constant 2 : index
    %c0_7 = arith.constant 0 : index
    %21 = vector.load %arg2[%c2, %c0_7] : memref<45x128xf32, #tpu.memory_space<vmem>>, vector<1x128xf32>
    %22 = vector.broadcast %21 : vector<1x128xf32> to vector<16x128xf32>
    %23 = arith.mulf %20, %22 : vector<16x128xf32>
    %24 = arith.addf %19, %23 : vector<16x128xf32>
    %c4_i32 = arith.constant 4 : i32
    %25 = tpu.dynamic_rotate %5 by %c4_i32 dim 1 : vector<16x128xf32>, i32 -> vector<16x128xf32>
    %c3 = arith.constant 3 : index
    %c0_8 = arith.constant 0 : index
    %26 = vector.load %arg2[%c3, %c0_8] : memref<45x128xf32, #tpu.memory_space<vmem>>, vector<1x128xf32>
    %27 = vector.broadcast %26 : vector<1x128xf32> to vector<16x128xf32>
    %28 = arith.mulf %25, %27 : vector<16x128xf32>
    %29 = arith.addf %24, %28 : vector<16x128xf32>
    %c3_i32 = arith.constant 3 : i32
    %30 = tpu.dynamic_rotate %5 by %c3_i32 dim 1 : vector<16x128xf32>, i32 -> vector<16x128xf32>
    %c4 = arith.constant 4 : index
    %c0_9 = arith.constant 0 : index
    %31 = vector.load %arg2[%c4, %c0_9] : memref<45x128xf32, #tpu.memory_space<vmem>>, vector<1x128xf32>
    %32 = vector.broadcast %31 : vector<1x128xf32> to vector<16x128xf32>
    %33 = arith.mulf %30, %32 : vector<16x128xf32>
    %34 = arith.addf %29, %33 : vector<16x128xf32>
    %c2_i32 = arith.constant 2 : i32
    %35 = tpu.dynamic_rotate %5 by %c2_i32 dim 1 : vector<16x128xf32>, i32 -> vector<16x128xf32>
    %c5 = arith.constant 5 : index
    %c0_10 = arith.constant 0 : index
    %36 = vector.load %arg2[%c5, %c0_10] : memref<45x128xf32, #tpu.memory_space<vmem>>, vector<1x128xf32>
    %37 = vector.broadcast %36 : vector<1x128xf32> to vector<16x128xf32>
    %38 = arith.mulf %35, %37 : vector<16x128xf32>
    %39 = arith.addf %34, %38 : vector<16x128xf32>
    %c1_i32 = arith.constant 1 : i32
    %40 = tpu.dynamic_rotate %5 by %c1_i32 dim 1 : vector<16x128xf32>, i32 -> vector<16x128xf32>
    %c6 = arith.constant 6 : index
    %c0_11 = arith.constant 0 : index
    %41 = vector.load %arg2[%c6, %c0_11] : memref<45x128xf32, #tpu.memory_space<vmem>>, vector<1x128xf32>
    %42 = vector.broadcast %41 : vector<1x128xf32> to vector<16x128xf32>
    %43 = arith.mulf %40, %42 : vector<16x128xf32>
    %44 = arith.addf %39, %43 : vector<16x128xf32>
    %c7 = arith.constant 7 : index
    %c0_12 = arith.constant 0 : index
    %45 = vector.load %arg2[%c7, %c0_12] : memref<45x128xf32, #tpu.memory_space<vmem>>, vector<1x128xf32>
    %46 = vector.broadcast %45 : vector<1x128xf32> to vector<16x128xf32>
    %47 = arith.mulf %5, %46 : vector<16x128xf32>
    %48 = arith.addf %44, %47 : vector<16x128xf32>
    %c127_i32 = arith.constant 127 : i32
    %49 = tpu.dynamic_rotate %5 by %c127_i32 dim 1 : vector<16x128xf32>, i32 -> vector<16x128xf32>
    %c8 = arith.constant 8 : index
    %c0_13 = arith.constant 0 : index
    %50 = vector.load %arg2[%c8, %c0_13] : memref<45x128xf32, #tpu.memory_space<vmem>>, vector<1x128xf32>
    %51 = vector.broadcast %50 : vector<1x128xf32> to vector<16x128xf32>
    %52 = arith.mulf %49, %51 : vector<16x128xf32>
    %53 = arith.addf %48, %52 : vector<16x128xf32>
    %c126_i32 = arith.constant 126 : i32
    %54 = tpu.dynamic_rotate %5 by %c126_i32 dim 1 : vector<16x128xf32>, i32 -> vector<16x128xf32>
    %c9 = arith.constant 9 : index
    %c0_14 = arith.constant 0 : index
    %55 = vector.load %arg2[%c9, %c0_14] : memref<45x128xf32, #tpu.memory_space<vmem>>, vector<1x128xf32>
    %56 = vector.broadcast %55 : vector<1x128xf32> to vector<16x128xf32>
    %57 = arith.mulf %54, %56 : vector<16x128xf32>
    %58 = arith.addf %53, %57 : vector<16x128xf32>
    %c125_i32 = arith.constant 125 : i32
    %59 = tpu.dynamic_rotate %5 by %c125_i32 dim 1 : vector<16x128xf32>, i32 -> vector<16x128xf32>
    %c10 = arith.constant 10 : index
    %c0_15 = arith.constant 0 : index
    %60 = vector.load %arg2[%c10, %c0_15] : memref<45x128xf32, #tpu.memory_space<vmem>>, vector<1x128xf32>
    %61 = vector.broadcast %60 : vector<1x128xf32> to vector<16x128xf32>
    %62 = arith.mulf %59, %61 : vector<16x128xf32>
    %63 = arith.addf %58, %62 : vector<16x128xf32>
    %c124_i32 = arith.constant 124 : i32
    %64 = tpu.dynamic_rotate %5 by %c124_i32 dim 1 : vector<16x128xf32>, i32 -> vector<16x128xf32>
    %c11 = arith.constant 11 : index
    %c0_16 = arith.constant 0 : index
    %65 = vector.load %arg2[%c11, %c0_16] : memref<45x128xf32, #tpu.memory_space<vmem>>, vector<1x128xf32>
    %66 = vector.broadcast %65 : vector<1x128xf32> to vector<16x128xf32>
    %67 = arith.mulf %64, %66 : vector<16x128xf32>
    %68 = arith.addf %63, %67 : vector<16x128xf32>
    %c123_i32 = arith.constant 123 : i32
    %69 = tpu.dynamic_rotate %5 by %c123_i32 dim 1 : vector<16x128xf32>, i32 -> vector<16x128xf32>
    %c12 = arith.constant 12 : index
    %c0_17 = arith.constant 0 : index
    %70 = vector.load %arg2[%c12, %c0_17] : memref<45x128xf32, #tpu.memory_space<vmem>>, vector<1x128xf32>
    %71 = vector.broadcast %70 : vector<1x128xf32> to vector<16x128xf32>
    %72 = arith.mulf %69, %71 : vector<16x128xf32>
    %73 = arith.addf %68, %72 : vector<16x128xf32>
    %c122_i32 = arith.constant 122 : i32
    %74 = tpu.dynamic_rotate %5 by %c122_i32 dim 1 : vector<16x128xf32>, i32 -> vector<16x128xf32>
    %c13 = arith.constant 13 : index
    %c0_18 = arith.constant 0 : index
    %75 = vector.load %arg2[%c13, %c0_18] : memref<45x128xf32, #tpu.memory_space<vmem>>, vector<1x128xf32>
    %76 = vector.broadcast %75 : vector<1x128xf32> to vector<16x128xf32>
    %77 = arith.mulf %74, %76 : vector<16x128xf32>
    %78 = arith.addf %73, %77 : vector<16x128xf32>
    %c121_i32 = arith.constant 121 : i32
    %79 = tpu.dynamic_rotate %5 by %c121_i32 dim 1 : vector<16x128xf32>, i32 -> vector<16x128xf32>
    %c14 = arith.constant 14 : index
    %c0_19 = arith.constant 0 : index
    %80 = vector.load %arg2[%c14, %c0_19] : memref<45x128xf32, #tpu.memory_space<vmem>>, vector<1x128xf32>
    %81 = vector.broadcast %80 : vector<1x128xf32> to vector<16x128xf32>
    %82 = arith.mulf %79, %81 : vector<16x128xf32>
    %83 = arith.addf %78, %82 : vector<16x128xf32>
    %c7_i32_20 = arith.constant 7 : i32
    %84 = tpu.dynamic_rotate %1 by %c7_i32_20 dim 1 : vector<16x128xf32>, i32 -> vector<16x128xf32>
    %c15 = arith.constant 15 : index
    %c0_21 = arith.constant 0 : index
    %85 = vector.load %arg2[%c15, %c0_21] : memref<45x128xf32, #tpu.memory_space<vmem>>, vector<1x128xf32>
    %86 = vector.broadcast %85 : vector<1x128xf32> to vector<16x128xf32>
    %87 = arith.mulf %84, %86 : vector<16x128xf32>
    %88 = arith.addf %83, %87 : vector<16x128xf32>
    %c6_i32_22 = arith.constant 6 : i32
    %89 = tpu.dynamic_rotate %1 by %c6_i32_22 dim 1 : vector<16x128xf32>, i32 -> vector<16x128xf32>
    %c16 = arith.constant 16 : index
    %c0_23 = arith.constant 0 : index
    %90 = vector.load %arg2[%c16, %c0_23] : memref<45x128xf32, #tpu.memory_space<vmem>>, vector<1x128xf32>
    %91 = vector.broadcast %90 : vector<1x128xf32> to vector<16x128xf32>
    %92 = arith.mulf %89, %91 : vector<16x128xf32>
    %93 = arith.addf %88, %92 : vector<16x128xf32>
    %c5_i32_24 = arith.constant 5 : i32
    %94 = tpu.dynamic_rotate %1 by %c5_i32_24 dim 1 : vector<16x128xf32>, i32 -> vector<16x128xf32>
    %c17 = arith.constant 17 : index
    %c0_25 = arith.constant 0 : index
    %95 = vector.load %arg2[%c17, %c0_25] : memref<45x128xf32, #tpu.memory_space<vmem>>, vector<1x128xf32>
    %96 = vector.broadcast %95 : vector<1x128xf32> to vector<16x128xf32>
    %97 = arith.mulf %94, %96 : vector<16x128xf32>
    %98 = arith.addf %93, %97 : vector<16x128xf32>
    %c4_i32_26 = arith.constant 4 : i32
    %99 = tpu.dynamic_rotate %1 by %c4_i32_26 dim 1 : vector<16x128xf32>, i32 -> vector<16x128xf32>
    %c18 = arith.constant 18 : index
    %c0_27 = arith.constant 0 : index
    %100 = vector.load %arg2[%c18, %c0_27] : memref<45x128xf32, #tpu.memory_space<vmem>>, vector<1x128xf32>
    %101 = vector.broadcast %100 : vector<1x128xf32> to vector<16x128xf32>
    %102 = arith.mulf %99, %101 : vector<16x128xf32>
    %103 = arith.addf %98, %102 : vector<16x128xf32>
    %c3_i32_28 = arith.constant 3 : i32
    %104 = tpu.dynamic_rotate %1 by %c3_i32_28 dim 1 : vector<16x128xf32>, i32 -> vector<16x128xf32>
    %c19 = arith.constant 19 : index
    %c0_29 = arith.constant 0 : index
    %105 = vector.load %arg2[%c19, %c0_29] : memref<45x128xf32, #tpu.memory_space<vmem>>, vector<1x128xf32>
    %106 = vector.broadcast %105 : vector<1x128xf32> to vector<16x128xf32>
    %107 = arith.mulf %104, %106 : vector<16x128xf32>
    %108 = arith.addf %103, %107 : vector<16x128xf32>
    %c2_i32_30 = arith.constant 2 : i32
    %109 = tpu.dynamic_rotate %1 by %c2_i32_30 dim 1 : vector<16x128xf32>, i32 -> vector<16x128xf32>
    %c20 = arith.constant 20 : index
    %c0_31 = arith.constant 0 : index
    %110 = vector.load %arg2[%c20, %c0_31] : memref<45x128xf32, #tpu.memory_space<vmem>>, vector<1x128xf32>
    %111 = vector.broadcast %110 : vector<1x128xf32> to vector<16x128xf32>
    %112 = arith.mulf %109, %111 : vector<16x128xf32>
    %113 = arith.addf %108, %112 : vector<16x128xf32>
    %c1_i32_32 = arith.constant 1 : i32
    %114 = tpu.dynamic_rotate %1 by %c1_i32_32 dim 1 : vector<16x128xf32>, i32 -> vector<16x128xf32>
    %c21 = arith.constant 21 : index
    %c0_33 = arith.constant 0 : index
    %115 = vector.load %arg2[%c21, %c0_33] : memref<45x128xf32, #tpu.memory_space<vmem>>, vector<1x128xf32>
    %116 = vector.broadcast %115 : vector<1x128xf32> to vector<16x128xf32>
    %117 = arith.mulf %114, %116 : vector<16x128xf32>
    %118 = arith.addf %113, %117 : vector<16x128xf32>
    %c22 = arith.constant 22 : index
    %c0_34 = arith.constant 0 : index
    %119 = vector.load %arg2[%c22, %c0_34] : memref<45x128xf32, #tpu.memory_space<vmem>>, vector<1x128xf32>
    %120 = vector.broadcast %119 : vector<1x128xf32> to vector<16x128xf32>
    %121 = arith.mulf %1, %120 : vector<16x128xf32>
    %122 = arith.addf %118, %121 : vector<16x128xf32>
    %c127_i32_35 = arith.constant 127 : i32
    %123 = tpu.dynamic_rotate %1 by %c127_i32_35 dim 1 : vector<16x128xf32>, i32 -> vector<16x128xf32>
    %c23 = arith.constant 23 : index
    %c0_36 = arith.constant 0 : index
    %124 = vector.load %arg2[%c23, %c0_36] : memref<45x128xf32, #tpu.memory_space<vmem>>, vector<1x128xf32>
    %125 = vector.broadcast %124 : vector<1x128xf32> to vector<16x128xf32>
    %126 = arith.mulf %123, %125 : vector<16x128xf32>
    %127 = arith.addf %122, %126 : vector<16x128xf32>
    %c126_i32_37 = arith.constant 126 : i32
    %128 = tpu.dynamic_rotate %1 by %c126_i32_37 dim 1 : vector<16x128xf32>, i32 -> vector<16x128xf32>
    %c24 = arith.constant 24 : index
    %c0_38 = arith.constant 0 : index
    %129 = vector.load %arg2[%c24, %c0_38] : memref<45x128xf32, #tpu.memory_space<vmem>>, vector<1x128xf32>
    %130 = vector.broadcast %129 : vector<1x128xf32> to vector<16x128xf32>
    %131 = arith.mulf %128, %130 : vector<16x128xf32>
    %132 = arith.addf %127, %131 : vector<16x128xf32>
    %c125_i32_39 = arith.constant 125 : i32
    %133 = tpu.dynamic_rotate %1 by %c125_i32_39 dim 1 : vector<16x128xf32>, i32 -> vector<16x128xf32>
    %c25 = arith.constant 25 : index
    %c0_40 = arith.constant 0 : index
    %134 = vector.load %arg2[%c25, %c0_40] : memref<45x128xf32, #tpu.memory_space<vmem>>, vector<1x128xf32>
    %135 = vector.broadcast %134 : vector<1x128xf32> to vector<16x128xf32>
    %136 = arith.mulf %133, %135 : vector<16x128xf32>
    %137 = arith.addf %132, %136 : vector<16x128xf32>
    %c124_i32_41 = arith.constant 124 : i32
    %138 = tpu.dynamic_rotate %1 by %c124_i32_41 dim 1 : vector<16x128xf32>, i32 -> vector<16x128xf32>
    %c26 = arith.constant 26 : index
    %c0_42 = arith.constant 0 : index
    %139 = vector.load %arg2[%c26, %c0_42] : memref<45x128xf32, #tpu.memory_space<vmem>>, vector<1x128xf32>
    %140 = vector.broadcast %139 : vector<1x128xf32> to vector<16x128xf32>
    %141 = arith.mulf %138, %140 : vector<16x128xf32>
    %142 = arith.addf %137, %141 : vector<16x128xf32>
    %c123_i32_43 = arith.constant 123 : i32
    %143 = tpu.dynamic_rotate %1 by %c123_i32_43 dim 1 : vector<16x128xf32>, i32 -> vector<16x128xf32>
    %c27 = arith.constant 27 : index
    %c0_44 = arith.constant 0 : index
    %144 = vector.load %arg2[%c27, %c0_44] : memref<45x128xf32, #tpu.memory_space<vmem>>, vector<1x128xf32>
    %145 = vector.broadcast %144 : vector<1x128xf32> to vector<16x128xf32>
    %146 = arith.mulf %143, %145 : vector<16x128xf32>
    %147 = arith.addf %142, %146 : vector<16x128xf32>
    %c122_i32_45 = arith.constant 122 : i32
    %148 = tpu.dynamic_rotate %1 by %c122_i32_45 dim 1 : vector<16x128xf32>, i32 -> vector<16x128xf32>
    %c28 = arith.constant 28 : index
    %c0_46 = arith.constant 0 : index
    %149 = vector.load %arg2[%c28, %c0_46] : memref<45x128xf32, #tpu.memory_space<vmem>>, vector<1x128xf32>
    %150 = vector.broadcast %149 : vector<1x128xf32> to vector<16x128xf32>
    %151 = arith.mulf %148, %150 : vector<16x128xf32>
    %152 = arith.addf %147, %151 : vector<16x128xf32>
    %c121_i32_47 = arith.constant 121 : i32
    %153 = tpu.dynamic_rotate %1 by %c121_i32_47 dim 1 : vector<16x128xf32>, i32 -> vector<16x128xf32>
    %c29 = arith.constant 29 : index
    %c0_48 = arith.constant 0 : index
    %154 = vector.load %arg2[%c29, %c0_48] : memref<45x128xf32, #tpu.memory_space<vmem>>, vector<1x128xf32>
    %155 = vector.broadcast %154 : vector<1x128xf32> to vector<16x128xf32>
    %156 = arith.mulf %153, %155 : vector<16x128xf32>
    %157 = arith.addf %152, %156 : vector<16x128xf32>
    %c7_i32_49 = arith.constant 7 : i32
    %158 = tpu.dynamic_rotate %8 by %c7_i32_49 dim 1 : vector<16x128xf32>, i32 -> vector<16x128xf32>
    %c30 = arith.constant 30 : index
    %c0_50 = arith.constant 0 : index
    %159 = vector.load %arg2[%c30, %c0_50] : memref<45x128xf32, #tpu.memory_space<vmem>>, vector<1x128xf32>
    %160 = vector.broadcast %159 : vector<1x128xf32> to vector<16x128xf32>
    %161 = arith.mulf %158, %160 : vector<16x128xf32>
    %162 = arith.addf %157, %161 : vector<16x128xf32>
    %c6_i32_51 = arith.constant 6 : i32
    %163 = tpu.dynamic_rotate %8 by %c6_i32_51 dim 1 : vector<16x128xf32>, i32 -> vector<16x128xf32>
    %c31 = arith.constant 31 : index
    %c0_52 = arith.constant 0 : index
    %164 = vector.load %arg2[%c31, %c0_52] : memref<45x128xf32, #tpu.memory_space<vmem>>, vector<1x128xf32>
    %165 = vector.broadcast %164 : vector<1x128xf32> to vector<16x128xf32>
    %166 = arith.mulf %163, %165 : vector<16x128xf32>
    %167 = arith.addf %162, %166 : vector<16x128xf32>
    %c5_i32_53 = arith.constant 5 : i32
    %168 = tpu.dynamic_rotate %8 by %c5_i32_53 dim 1 : vector<16x128xf32>, i32 -> vector<16x128xf32>
    %c32 = arith.constant 32 : index
    %c0_54 = arith.constant 0 : index
    %169 = vector.load %arg2[%c32, %c0_54] : memref<45x128xf32, #tpu.memory_space<vmem>>, vector<1x128xf32>
    %170 = vector.broadcast %169 : vector<1x128xf32> to vector<16x128xf32>
    %171 = arith.mulf %168, %170 : vector<16x128xf32>
    %172 = arith.addf %167, %171 : vector<16x128xf32>
    %c4_i32_55 = arith.constant 4 : i32
    %173 = tpu.dynamic_rotate %8 by %c4_i32_55 dim 1 : vector<16x128xf32>, i32 -> vector<16x128xf32>
    %c33 = arith.constant 33 : index
    %c0_56 = arith.constant 0 : index
    %174 = vector.load %arg2[%c33, %c0_56] : memref<45x128xf32, #tpu.memory_space<vmem>>, vector<1x128xf32>
    %175 = vector.broadcast %174 : vector<1x128xf32> to vector<16x128xf32>
    %176 = arith.mulf %173, %175 : vector<16x128xf32>
    %177 = arith.addf %172, %176 : vector<16x128xf32>
    %c3_i32_57 = arith.constant 3 : i32
    %178 = tpu.dynamic_rotate %8 by %c3_i32_57 dim 1 : vector<16x128xf32>, i32 -> vector<16x128xf32>
    %c34 = arith.constant 34 : index
    %c0_58 = arith.constant 0 : index
    %179 = vector.load %arg2[%c34, %c0_58] : memref<45x128xf32, #tpu.memory_space<vmem>>, vector<1x128xf32>
    %180 = vector.broadcast %179 : vector<1x128xf32> to vector<16x128xf32>
    %181 = arith.mulf %178, %180 : vector<16x128xf32>
    %182 = arith.addf %177, %181 : vector<16x128xf32>
    %c2_i32_59 = arith.constant 2 : i32
    %183 = tpu.dynamic_rotate %8 by %c2_i32_59 dim 1 : vector<16x128xf32>, i32 -> vector<16x128xf32>
    %c35 = arith.constant 35 : index
    %c0_60 = arith.constant 0 : index
    %184 = vector.load %arg2[%c35, %c0_60] : memref<45x128xf32, #tpu.memory_space<vmem>>, vector<1x128xf32>
    %185 = vector.broadcast %184 : vector<1x128xf32> to vector<16x128xf32>
    %186 = arith.mulf %183, %185 : vector<16x128xf32>
    %187 = arith.addf %182, %186 : vector<16x128xf32>
    %c1_i32_61 = arith.constant 1 : i32
    %188 = tpu.dynamic_rotate %8 by %c1_i32_61 dim 1 : vector<16x128xf32>, i32 -> vector<16x128xf32>
    %c36 = arith.constant 36 : index
    %c0_62 = arith.constant 0 : index
    %189 = vector.load %arg2[%c36, %c0_62] : memref<45x128xf32, #tpu.memory_space<vmem>>, vector<1x128xf32>
    %190 = vector.broadcast %189 : vector<1x128xf32> to vector<16x128xf32>
    %191 = arith.mulf %188, %190 : vector<16x128xf32>
    %192 = arith.addf %187, %191 : vector<16x128xf32>
    %c37 = arith.constant 37 : index
    %c0_63 = arith.constant 0 : index
    %193 = vector.load %arg2[%c37, %c0_63] : memref<45x128xf32, #tpu.memory_space<vmem>>, vector<1x128xf32>
    %194 = vector.broadcast %193 : vector<1x128xf32> to vector<16x128xf32>
    %195 = arith.mulf %8, %194 : vector<16x128xf32>
    %196 = arith.addf %192, %195 : vector<16x128xf32>
    %c127_i32_64 = arith.constant 127 : i32
    %197 = tpu.dynamic_rotate %8 by %c127_i32_64 dim 1 : vector<16x128xf32>, i32 -> vector<16x128xf32>
    %c38 = arith.constant 38 : index
    %c0_65 = arith.constant 0 : index
    %198 = vector.load %arg2[%c38, %c0_65] : memref<45x128xf32, #tpu.memory_space<vmem>>, vector<1x128xf32>
    %199 = vector.broadcast %198 : vector<1x128xf32> to vector<16x128xf32>
    %200 = arith.mulf %197, %199 : vector<16x128xf32>
    %201 = arith.addf %196, %200 : vector<16x128xf32>
    %c126_i32_66 = arith.constant 126 : i32
    %202 = tpu.dynamic_rotate %8 by %c126_i32_66 dim 1 : vector<16x128xf32>, i32 -> vector<16x128xf32>
    %c39 = arith.constant 39 : index
    %c0_67 = arith.constant 0 : index
    %203 = vector.load %arg2[%c39, %c0_67] : memref<45x128xf32, #tpu.memory_space<vmem>>, vector<1x128xf32>
    %204 = vector.broadcast %203 : vector<1x128xf32> to vector<16x128xf32>
    %205 = arith.mulf %202, %204 : vector<16x128xf32>
    %206 = arith.addf %201, %205 : vector<16x128xf32>
    %c125_i32_68 = arith.constant 125 : i32
    %207 = tpu.dynamic_rotate %8 by %c125_i32_68 dim 1 : vector<16x128xf32>, i32 -> vector<16x128xf32>
    %c40 = arith.constant 40 : index
    %c0_69 = arith.constant 0 : index
    %208 = vector.load %arg2[%c40, %c0_69] : memref<45x128xf32, #tpu.memory_space<vmem>>, vector<1x128xf32>
    %209 = vector.broadcast %208 : vector<1x128xf32> to vector<16x128xf32>
    %210 = arith.mulf %207, %209 : vector<16x128xf32>
    %211 = arith.addf %206, %210 : vector<16x128xf32>
    %c124_i32_70 = arith.constant 124 : i32
    %212 = tpu.dynamic_rotate %8 by %c124_i32_70 dim 1 : vector<16x128xf32>, i32 -> vector<16x128xf32>
    %c41 = arith.constant 41 : index
    %c0_71 = arith.constant 0 : index
    %213 = vector.load %arg2[%c41, %c0_71] : memref<45x128xf32, #tpu.memory_space<vmem>>, vector<1x128xf32>
    %214 = vector.broadcast %213 : vector<1x128xf32> to vector<16x128xf32>
    %215 = arith.mulf %212, %214 : vector<16x128xf32>
    %216 = arith.addf %211, %215 : vector<16x128xf32>
    %c123_i32_72 = arith.constant 123 : i32
    %217 = tpu.dynamic_rotate %8 by %c123_i32_72 dim 1 : vector<16x128xf32>, i32 -> vector<16x128xf32>
    %c42 = arith.constant 42 : index
    %c0_73 = arith.constant 0 : index
    %218 = vector.load %arg2[%c42, %c0_73] : memref<45x128xf32, #tpu.memory_space<vmem>>, vector<1x128xf32>
    %219 = vector.broadcast %218 : vector<1x128xf32> to vector<16x128xf32>
    %220 = arith.mulf %217, %219 : vector<16x128xf32>
    %221 = arith.addf %216, %220 : vector<16x128xf32>
    %c122_i32_74 = arith.constant 122 : i32
    %222 = tpu.dynamic_rotate %8 by %c122_i32_74 dim 1 : vector<16x128xf32>, i32 -> vector<16x128xf32>
    %c43 = arith.constant 43 : index
    %c0_75 = arith.constant 0 : index
    %223 = vector.load %arg2[%c43, %c0_75] : memref<45x128xf32, #tpu.memory_space<vmem>>, vector<1x128xf32>
    %224 = vector.broadcast %223 : vector<1x128xf32> to vector<16x128xf32>
    %225 = arith.mulf %222, %224 : vector<16x128xf32>
    %226 = arith.addf %221, %225 : vector<16x128xf32>
    %c121_i32_76 = arith.constant 121 : i32
    %227 = tpu.dynamic_rotate %8 by %c121_i32_76 dim 1 : vector<16x128xf32>, i32 -> vector<16x128xf32>
    %c44 = arith.constant 44 : index
    %c0_77 = arith.constant 0 : index
    %228 = vector.load %arg2[%c44, %c0_77] : memref<45x128xf32, #tpu.memory_space<vmem>>, vector<1x128xf32>
    %229 = vector.broadcast %228 : vector<1x128xf32> to vector<16x128xf32>
    %230 = arith.mulf %227, %229 : vector<16x128xf32>
    %231 = arith.addf %226, %230 : vector<16x128xf32>
    %cst = arith.constant 0.000000e+00 : f32
    %232 = vector.broadcast %cst : f32 to vector<16x128xf32>
    %233 = arith.maximumf %231, %232 : vector<16x128xf32>
    %c0_78 = arith.constant 0 : index
    %c0_79 = arith.constant 0 : index
    %234 = vector.load %arg5[%c0_78, %c0_79] : memref<1x128xf32, #tpu.memory_space<vmem>>, vector<1x128xf32>
    %235 = vector.broadcast %234 : vector<1x128xf32> to vector<16x128xf32>
    %236 = arith.addf %1, %235 : vector<16x128xf32>
    %237 = vector.extract_strided_slice %233 {offsets = [1, 0], sizes = [1, 128], strides = [1, 1]} : vector<16x128xf32> to vector<1x128xf32>
    %238 = vector.extract_strided_slice %233 {offsets = [0, 0], sizes = [15, 128], strides = [1, 1]} : vector<16x128xf32> to vector<15x128xf32>
    %239 = tpu.concatenate %237, %238 in 0 : vector<1x128xf32>, vector<15x128xf32> -> vector<16x128xf32>
    %240 = vector.extract_strided_slice %233 {offsets = [1, 0], sizes = [15, 128], strides = [1, 1]} : vector<16x128xf32> to vector<15x128xf32>
    %241 = vector.extract_strided_slice %233 {offsets = [14, 0], sizes = [1, 128], strides = [1, 1]} : vector<16x128xf32> to vector<1x128xf32>
    %242 = tpu.concatenate %240, %241 in 0 : vector<15x128xf32>, vector<1x128xf32> -> vector<16x128xf32>
    %c7_i32_80 = arith.constant 7 : i32
    %243 = tpu.dynamic_rotate %239 by %c7_i32_80 dim 1 : vector<16x128xf32>, i32 -> vector<16x128xf32>
    %c0_81 = arith.constant 0 : index
    %c0_82 = arith.constant 0 : index
    %244 = vector.load %arg4[%c0_81, %c0_82] : memref<45x128xf32, #tpu.memory_space<vmem>>, vector<1x128xf32>
    %245 = vector.broadcast %244 : vector<1x128xf32> to vector<16x128xf32>
    %246 = arith.mulf %243, %245 : vector<16x128xf32>
    %247 = arith.addf %236, %246 : vector<16x128xf32>
    %c6_i32_83 = arith.constant 6 : i32
    %248 = tpu.dynamic_rotate %239 by %c6_i32_83 dim 1 : vector<16x128xf32>, i32 -> vector<16x128xf32>
    %c1_84 = arith.constant 1 : index
    %c0_85 = arith.constant 0 : index
    %249 = vector.load %arg4[%c1_84, %c0_85] : memref<45x128xf32, #tpu.memory_space<vmem>>, vector<1x128xf32>
    %250 = vector.broadcast %249 : vector<1x128xf32> to vector<16x128xf32>
    %251 = arith.mulf %248, %250 : vector<16x128xf32>
    %252 = arith.addf %247, %251 : vector<16x128xf32>
    %c5_i32_86 = arith.constant 5 : i32
    %253 = tpu.dynamic_rotate %239 by %c5_i32_86 dim 1 : vector<16x128xf32>, i32 -> vector<16x128xf32>
    %c2_87 = arith.constant 2 : index
    %c0_88 = arith.constant 0 : index
    %254 = vector.load %arg4[%c2_87, %c0_88] : memref<45x128xf32, #tpu.memory_space<vmem>>, vector<1x128xf32>
    %255 = vector.broadcast %254 : vector<1x128xf32> to vector<16x128xf32>
    %256 = arith.mulf %253, %255 : vector<16x128xf32>
    %257 = arith.addf %252, %256 : vector<16x128xf32>
    %c4_i32_89 = arith.constant 4 : i32
    %258 = tpu.dynamic_rotate %239 by %c4_i32_89 dim 1 : vector<16x128xf32>, i32 -> vector<16x128xf32>
    %c3_90 = arith.constant 3 : index
    %c0_91 = arith.constant 0 : index
    %259 = vector.load %arg4[%c3_90, %c0_91] : memref<45x128xf32, #tpu.memory_space<vmem>>, vector<1x128xf32>
    %260 = vector.broadcast %259 : vector<1x128xf32> to vector<16x128xf32>
    %261 = arith.mulf %258, %260 : vector<16x128xf32>
    %262 = arith.addf %257, %261 : vector<16x128xf32>
    %c3_i32_92 = arith.constant 3 : i32
    %263 = tpu.dynamic_rotate %239 by %c3_i32_92 dim 1 : vector<16x128xf32>, i32 -> vector<16x128xf32>
    %c4_93 = arith.constant 4 : index
    %c0_94 = arith.constant 0 : index
    %264 = vector.load %arg4[%c4_93, %c0_94] : memref<45x128xf32, #tpu.memory_space<vmem>>, vector<1x128xf32>
    %265 = vector.broadcast %264 : vector<1x128xf32> to vector<16x128xf32>
    %266 = arith.mulf %263, %265 : vector<16x128xf32>
    %267 = arith.addf %262, %266 : vector<16x128xf32>
    %c2_i32_95 = arith.constant 2 : i32
    %268 = tpu.dynamic_rotate %239 by %c2_i32_95 dim 1 : vector<16x128xf32>, i32 -> vector<16x128xf32>
    %c5_96 = arith.constant 5 : index
    %c0_97 = arith.constant 0 : index
    %269 = vector.load %arg4[%c5_96, %c0_97] : memref<45x128xf32, #tpu.memory_space<vmem>>, vector<1x128xf32>
    %270 = vector.broadcast %269 : vector<1x128xf32> to vector<16x128xf32>
    %271 = arith.mulf %268, %270 : vector<16x128xf32>
    %272 = arith.addf %267, %271 : vector<16x128xf32>
    %c1_i32_98 = arith.constant 1 : i32
    %273 = tpu.dynamic_rotate %239 by %c1_i32_98 dim 1 : vector<16x128xf32>, i32 -> vector<16x128xf32>
    %c6_99 = arith.constant 6 : index
    %c0_100 = arith.constant 0 : index
    %274 = vector.load %arg4[%c6_99, %c0_100] : memref<45x128xf32, #tpu.memory_space<vmem>>, vector<1x128xf32>
    %275 = vector.broadcast %274 : vector<1x128xf32> to vector<16x128xf32>
    %276 = arith.mulf %273, %275 : vector<16x128xf32>
    %277 = arith.addf %272, %276 : vector<16x128xf32>
    %c7_101 = arith.constant 7 : index
    %c0_102 = arith.constant 0 : index
    %278 = vector.load %arg4[%c7_101, %c0_102] : memref<45x128xf32, #tpu.memory_space<vmem>>, vector<1x128xf32>
    %279 = vector.broadcast %278 : vector<1x128xf32> to vector<16x128xf32>
    %280 = arith.mulf %239, %279 : vector<16x128xf32>
    %281 = arith.addf %277, %280 : vector<16x128xf32>
    %c127_i32_103 = arith.constant 127 : i32
    %282 = tpu.dynamic_rotate %239 by %c127_i32_103 dim 1 : vector<16x128xf32>, i32 -> vector<16x128xf32>
    %c8_104 = arith.constant 8 : index
    %c0_105 = arith.constant 0 : index
    %283 = vector.load %arg4[%c8_104, %c0_105] : memref<45x128xf32, #tpu.memory_space<vmem>>, vector<1x128xf32>
    %284 = vector.broadcast %283 : vector<1x128xf32> to vector<16x128xf32>
    %285 = arith.mulf %282, %284 : vector<16x128xf32>
    %286 = arith.addf %281, %285 : vector<16x128xf32>
    %c126_i32_106 = arith.constant 126 : i32
    %287 = tpu.dynamic_rotate %239 by %c126_i32_106 dim 1 : vector<16x128xf32>, i32 -> vector<16x128xf32>
    %c9_107 = arith.constant 9 : index
    %c0_108 = arith.constant 0 : index
    %288 = vector.load %arg4[%c9_107, %c0_108] : memref<45x128xf32, #tpu.memory_space<vmem>>, vector<1x128xf32>
    %289 = vector.broadcast %288 : vector<1x128xf32> to vector<16x128xf32>
    %290 = arith.mulf %287, %289 : vector<16x128xf32>
    %291 = arith.addf %286, %290 : vector<16x128xf32>
    %c125_i32_109 = arith.constant 125 : i32
    %292 = tpu.dynamic_rotate %239 by %c125_i32_109 dim 1 : vector<16x128xf32>, i32 -> vector<16x128xf32>
    %c10_110 = arith.constant 10 : index
    %c0_111 = arith.constant 0 : index
    %293 = vector.load %arg4[%c10_110, %c0_111] : memref<45x128xf32, #tpu.memory_space<vmem>>, vector<1x128xf32>
    %294 = vector.broadcast %293 : vector<1x128xf32> to vector<16x128xf32>
    %295 = arith.mulf %292, %294 : vector<16x128xf32>
    %296 = arith.addf %291, %295 : vector<16x128xf32>
    %c124_i32_112 = arith.constant 124 : i32
    %297 = tpu.dynamic_rotate %239 by %c124_i32_112 dim 1 : vector<16x128xf32>, i32 -> vector<16x128xf32>
    %c11_113 = arith.constant 11 : index
    %c0_114 = arith.constant 0 : index
    %298 = vector.load %arg4[%c11_113, %c0_114] : memref<45x128xf32, #tpu.memory_space<vmem>>, vector<1x128xf32>
    %299 = vector.broadcast %298 : vector<1x128xf32> to vector<16x128xf32>
    %300 = arith.mulf %297, %299 : vector<16x128xf32>
    %301 = arith.addf %296, %300 : vector<16x128xf32>
    %c123_i32_115 = arith.constant 123 : i32
    %302 = tpu.dynamic_rotate %239 by %c123_i32_115 dim 1 : vector<16x128xf32>, i32 -> vector<16x128xf32>
    %c12_116 = arith.constant 12 : index
    %c0_117 = arith.constant 0 : index
    %303 = vector.load %arg4[%c12_116, %c0_117] : memref<45x128xf32, #tpu.memory_space<vmem>>, vector<1x128xf32>
    %304 = vector.broadcast %303 : vector<1x128xf32> to vector<16x128xf32>
    %305 = arith.mulf %302, %304 : vector<16x128xf32>
    %306 = arith.addf %301, %305 : vector<16x128xf32>
    %c122_i32_118 = arith.constant 122 : i32
    %307 = tpu.dynamic_rotate %239 by %c122_i32_118 dim 1 : vector<16x128xf32>, i32 -> vector<16x128xf32>
    %c13_119 = arith.constant 13 : index
    %c0_120 = arith.constant 0 : index
    %308 = vector.load %arg4[%c13_119, %c0_120] : memref<45x128xf32, #tpu.memory_space<vmem>>, vector<1x128xf32>
    %309 = vector.broadcast %308 : vector<1x128xf32> to vector<16x128xf32>
    %310 = arith.mulf %307, %309 : vector<16x128xf32>
    %311 = arith.addf %306, %310 : vector<16x128xf32>
    %c121_i32_121 = arith.constant 121 : i32
    %312 = tpu.dynamic_rotate %239 by %c121_i32_121 dim 1 : vector<16x128xf32>, i32 -> vector<16x128xf32>
    %c14_122 = arith.constant 14 : index
    %c0_123 = arith.constant 0 : index
    %313 = vector.load %arg4[%c14_122, %c0_123] : memref<45x128xf32, #tpu.memory_space<vmem>>, vector<1x128xf32>
    %314 = vector.broadcast %313 : vector<1x128xf32> to vector<16x128xf32>
    %315 = arith.mulf %312, %314 : vector<16x128xf32>
    %316 = arith.addf %311, %315 : vector<16x128xf32>
    %c7_i32_124 = arith.constant 7 : i32
    %317 = tpu.dynamic_rotate %233 by %c7_i32_124 dim 1 : vector<16x128xf32>, i32 -> vector<16x128xf32>
    %c15_125 = arith.constant 15 : index
    %c0_126 = arith.constant 0 : index
    %318 = vector.load %arg4[%c15_125, %c0_126] : memref<45x128xf32, #tpu.memory_space<vmem>>, vector<1x128xf32>
    %319 = vector.broadcast %318 : vector<1x128xf32> to vector<16x128xf32>
    %320 = arith.mulf %317, %319 : vector<16x128xf32>
    %321 = arith.addf %316, %320 : vector<16x128xf32>
    %c6_i32_127 = arith.constant 6 : i32
    %322 = tpu.dynamic_rotate %233 by %c6_i32_127 dim 1 : vector<16x128xf32>, i32 -> vector<16x128xf32>
    %c16_128 = arith.constant 16 : index
    %c0_129 = arith.constant 0 : index
    %323 = vector.load %arg4[%c16_128, %c0_129] : memref<45x128xf32, #tpu.memory_space<vmem>>, vector<1x128xf32>
    %324 = vector.broadcast %323 : vector<1x128xf32> to vector<16x128xf32>
    %325 = arith.mulf %322, %324 : vector<16x128xf32>
    %326 = arith.addf %321, %325 : vector<16x128xf32>
    %c5_i32_130 = arith.constant 5 : i32
    %327 = tpu.dynamic_rotate %233 by %c5_i32_130 dim 1 : vector<16x128xf32>, i32 -> vector<16x128xf32>
    %c17_131 = arith.constant 17 : index
    %c0_132 = arith.constant 0 : index
    %328 = vector.load %arg4[%c17_131, %c0_132] : memref<45x128xf32, #tpu.memory_space<vmem>>, vector<1x128xf32>
    %329 = vector.broadcast %328 : vector<1x128xf32> to vector<16x128xf32>
    %330 = arith.mulf %327, %329 : vector<16x128xf32>
    %331 = arith.addf %326, %330 : vector<16x128xf32>
    %c4_i32_133 = arith.constant 4 : i32
    %332 = tpu.dynamic_rotate %233 by %c4_i32_133 dim 1 : vector<16x128xf32>, i32 -> vector<16x128xf32>
    %c18_134 = arith.constant 18 : index
    %c0_135 = arith.constant 0 : index
    %333 = vector.load %arg4[%c18_134, %c0_135] : memref<45x128xf32, #tpu.memory_space<vmem>>, vector<1x128xf32>
    %334 = vector.broadcast %333 : vector<1x128xf32> to vector<16x128xf32>
    %335 = arith.mulf %332, %334 : vector<16x128xf32>
    %336 = arith.addf %331, %335 : vector<16x128xf32>
    %c3_i32_136 = arith.constant 3 : i32
    %337 = tpu.dynamic_rotate %233 by %c3_i32_136 dim 1 : vector<16x128xf32>, i32 -> vector<16x128xf32>
    %c19_137 = arith.constant 19 : index
    %c0_138 = arith.constant 0 : index
    %338 = vector.load %arg4[%c19_137, %c0_138] : memref<45x128xf32, #tpu.memory_space<vmem>>, vector<1x128xf32>
    %339 = vector.broadcast %338 : vector<1x128xf32> to vector<16x128xf32>
    %340 = arith.mulf %337, %339 : vector<16x128xf32>
    %341 = arith.addf %336, %340 : vector<16x128xf32>
    %c2_i32_139 = arith.constant 2 : i32
    %342 = tpu.dynamic_rotate %233 by %c2_i32_139 dim 1 : vector<16x128xf32>, i32 -> vector<16x128xf32>
    %c20_140 = arith.constant 20 : index
    %c0_141 = arith.constant 0 : index
    %343 = vector.load %arg4[%c20_140, %c0_141] : memref<45x128xf32, #tpu.memory_space<vmem>>, vector<1x128xf32>
    %344 = vector.broadcast %343 : vector<1x128xf32> to vector<16x128xf32>
    %345 = arith.mulf %342, %344 : vector<16x128xf32>
    %346 = arith.addf %341, %345 : vector<16x128xf32>
    %c1_i32_142 = arith.constant 1 : i32
    %347 = tpu.dynamic_rotate %233 by %c1_i32_142 dim 1 : vector<16x128xf32>, i32 -> vector<16x128xf32>
    %c21_143 = arith.constant 21 : index
    %c0_144 = arith.constant 0 : index
    %348 = vector.load %arg4[%c21_143, %c0_144] : memref<45x128xf32, #tpu.memory_space<vmem>>, vector<1x128xf32>
    %349 = vector.broadcast %348 : vector<1x128xf32> to vector<16x128xf32>
    %350 = arith.mulf %347, %349 : vector<16x128xf32>
    %351 = arith.addf %346, %350 : vector<16x128xf32>
    %c22_145 = arith.constant 22 : index
    %c0_146 = arith.constant 0 : index
    %352 = vector.load %arg4[%c22_145, %c0_146] : memref<45x128xf32, #tpu.memory_space<vmem>>, vector<1x128xf32>
    %353 = vector.broadcast %352 : vector<1x128xf32> to vector<16x128xf32>
    %354 = arith.mulf %233, %353 : vector<16x128xf32>
    %355 = arith.addf %351, %354 : vector<16x128xf32>
    %c127_i32_147 = arith.constant 127 : i32
    %356 = tpu.dynamic_rotate %233 by %c127_i32_147 dim 1 : vector<16x128xf32>, i32 -> vector<16x128xf32>
    %c23_148 = arith.constant 23 : index
    %c0_149 = arith.constant 0 : index
    %357 = vector.load %arg4[%c23_148, %c0_149] : memref<45x128xf32, #tpu.memory_space<vmem>>, vector<1x128xf32>
    %358 = vector.broadcast %357 : vector<1x128xf32> to vector<16x128xf32>
    %359 = arith.mulf %356, %358 : vector<16x128xf32>
    %360 = arith.addf %355, %359 : vector<16x128xf32>
    %c126_i32_150 = arith.constant 126 : i32
    %361 = tpu.dynamic_rotate %233 by %c126_i32_150 dim 1 : vector<16x128xf32>, i32 -> vector<16x128xf32>
    %c24_151 = arith.constant 24 : index
    %c0_152 = arith.constant 0 : index
    %362 = vector.load %arg4[%c24_151, %c0_152] : memref<45x128xf32, #tpu.memory_space<vmem>>, vector<1x128xf32>
    %363 = vector.broadcast %362 : vector<1x128xf32> to vector<16x128xf32>
    %364 = arith.mulf %361, %363 : vector<16x128xf32>
    %365 = arith.addf %360, %364 : vector<16x128xf32>
    %c125_i32_153 = arith.constant 125 : i32
    %366 = tpu.dynamic_rotate %233 by %c125_i32_153 dim 1 : vector<16x128xf32>, i32 -> vector<16x128xf32>
    %c25_154 = arith.constant 25 : index
    %c0_155 = arith.constant 0 : index
    %367 = vector.load %arg4[%c25_154, %c0_155] : memref<45x128xf32, #tpu.memory_space<vmem>>, vector<1x128xf32>
    %368 = vector.broadcast %367 : vector<1x128xf32> to vector<16x128xf32>
    %369 = arith.mulf %366, %368 : vector<16x128xf32>
    %370 = arith.addf %365, %369 : vector<16x128xf32>
    %c124_i32_156 = arith.constant 124 : i32
    %371 = tpu.dynamic_rotate %233 by %c124_i32_156 dim 1 : vector<16x128xf32>, i32 -> vector<16x128xf32>
    %c26_157 = arith.constant 26 : index
    %c0_158 = arith.constant 0 : index
    %372 = vector.load %arg4[%c26_157, %c0_158] : memref<45x128xf32, #tpu.memory_space<vmem>>, vector<1x128xf32>
    %373 = vector.broadcast %372 : vector<1x128xf32> to vector<16x128xf32>
    %374 = arith.mulf %371, %373 : vector<16x128xf32>
    %375 = arith.addf %370, %374 : vector<16x128xf32>
    %c123_i32_159 = arith.constant 123 : i32
    %376 = tpu.dynamic_rotate %233 by %c123_i32_159 dim 1 : vector<16x128xf32>, i32 -> vector<16x128xf32>
    %c27_160 = arith.constant 27 : index
    %c0_161 = arith.constant 0 : index
    %377 = vector.load %arg4[%c27_160, %c0_161] : memref<45x128xf32, #tpu.memory_space<vmem>>, vector<1x128xf32>
    %378 = vector.broadcast %377 : vector<1x128xf32> to vector<16x128xf32>
    %379 = arith.mulf %376, %378 : vector<16x128xf32>
    %380 = arith.addf %375, %379 : vector<16x128xf32>
    %c122_i32_162 = arith.constant 122 : i32
    %381 = tpu.dynamic_rotate %233 by %c122_i32_162 dim 1 : vector<16x128xf32>, i32 -> vector<16x128xf32>
    %c28_163 = arith.constant 28 : index
    %c0_164 = arith.constant 0 : index
    %382 = vector.load %arg4[%c28_163, %c0_164] : memref<45x128xf32, #tpu.memory_space<vmem>>, vector<1x128xf32>
    %383 = vector.broadcast %382 : vector<1x128xf32> to vector<16x128xf32>
    %384 = arith.mulf %381, %383 : vector<16x128xf32>
    %385 = arith.addf %380, %384 : vector<16x128xf32>
    %c121_i32_165 = arith.constant 121 : i32
    %386 = tpu.dynamic_rotate %233 by %c121_i32_165 dim 1 : vector<16x128xf32>, i32 -> vector<16x128xf32>
    %c29_166 = arith.constant 29 : index
    %c0_167 = arith.constant 0 : index
    %387 = vector.load %arg4[%c29_166, %c0_167] : memref<45x128xf32, #tpu.memory_space<vmem>>, vector<1x128xf32>
    %388 = vector.broadcast %387 : vector<1x128xf32> to vector<16x128xf32>
    %389 = arith.mulf %386, %388 : vector<16x128xf32>
    %390 = arith.addf %385, %389 : vector<16x128xf32>
    %c7_i32_168 = arith.constant 7 : i32
    %391 = tpu.dynamic_rotate %242 by %c7_i32_168 dim 1 : vector<16x128xf32>, i32 -> vector<16x128xf32>
    %c30_169 = arith.constant 30 : index
    %c0_170 = arith.constant 0 : index
    %392 = vector.load %arg4[%c30_169, %c0_170] : memref<45x128xf32, #tpu.memory_space<vmem>>, vector<1x128xf32>
    %393 = vector.broadcast %392 : vector<1x128xf32> to vector<16x128xf32>
    %394 = arith.mulf %391, %393 : vector<16x128xf32>
    %395 = arith.addf %390, %394 : vector<16x128xf32>
    %c6_i32_171 = arith.constant 6 : i32
    %396 = tpu.dynamic_rotate %242 by %c6_i32_171 dim 1 : vector<16x128xf32>, i32 -> vector<16x128xf32>
    %c31_172 = arith.constant 31 : index
    %c0_173 = arith.constant 0 : index
    %397 = vector.load %arg4[%c31_172, %c0_173] : memref<45x128xf32, #tpu.memory_space<vmem>>, vector<1x128xf32>
    %398 = vector.broadcast %397 : vector<1x128xf32> to vector<16x128xf32>
    %399 = arith.mulf %396, %398 : vector<16x128xf32>
    %400 = arith.addf %395, %399 : vector<16x128xf32>
    %c5_i32_174 = arith.constant 5 : i32
    %401 = tpu.dynamic_rotate %242 by %c5_i32_174 dim 1 : vector<16x128xf32>, i32 -> vector<16x128xf32>
    %c32_175 = arith.constant 32 : index
    %c0_176 = arith.constant 0 : index
    %402 = vector.load %arg4[%c32_175, %c0_176] : memref<45x128xf32, #tpu.memory_space<vmem>>, vector<1x128xf32>
    %403 = vector.broadcast %402 : vector<1x128xf32> to vector<16x128xf32>
    %404 = arith.mulf %401, %403 : vector<16x128xf32>
    %405 = arith.addf %400, %404 : vector<16x128xf32>
    %c4_i32_177 = arith.constant 4 : i32
    %406 = tpu.dynamic_rotate %242 by %c4_i32_177 dim 1 : vector<16x128xf32>, i32 -> vector<16x128xf32>
    %c33_178 = arith.constant 33 : index
    %c0_179 = arith.constant 0 : index
    %407 = vector.load %arg4[%c33_178, %c0_179] : memref<45x128xf32, #tpu.memory_space<vmem>>, vector<1x128xf32>
    %408 = vector.broadcast %407 : vector<1x128xf32> to vector<16x128xf32>
    %409 = arith.mulf %406, %408 : vector<16x128xf32>
    %410 = arith.addf %405, %409 : vector<16x128xf32>
    %c3_i32_180 = arith.constant 3 : i32
    %411 = tpu.dynamic_rotate %242 by %c3_i32_180 dim 1 : vector<16x128xf32>, i32 -> vector<16x128xf32>
    %c34_181 = arith.constant 34 : index
    %c0_182 = arith.constant 0 : index
    %412 = vector.load %arg4[%c34_181, %c0_182] : memref<45x128xf32, #tpu.memory_space<vmem>>, vector<1x128xf32>
    %413 = vector.broadcast %412 : vector<1x128xf32> to vector<16x128xf32>
    %414 = arith.mulf %411, %413 : vector<16x128xf32>
    %415 = arith.addf %410, %414 : vector<16x128xf32>
    %c2_i32_183 = arith.constant 2 : i32
    %416 = tpu.dynamic_rotate %242 by %c2_i32_183 dim 1 : vector<16x128xf32>, i32 -> vector<16x128xf32>
    %c35_184 = arith.constant 35 : index
    %c0_185 = arith.constant 0 : index
    %417 = vector.load %arg4[%c35_184, %c0_185] : memref<45x128xf32, #tpu.memory_space<vmem>>, vector<1x128xf32>
    %418 = vector.broadcast %417 : vector<1x128xf32> to vector<16x128xf32>
    %419 = arith.mulf %416, %418 : vector<16x128xf32>
    %420 = arith.addf %415, %419 : vector<16x128xf32>
    %c1_i32_186 = arith.constant 1 : i32
    %421 = tpu.dynamic_rotate %242 by %c1_i32_186 dim 1 : vector<16x128xf32>, i32 -> vector<16x128xf32>
    %c36_187 = arith.constant 36 : index
    %c0_188 = arith.constant 0 : index
    %422 = vector.load %arg4[%c36_187, %c0_188] : memref<45x128xf32, #tpu.memory_space<vmem>>, vector<1x128xf32>
    %423 = vector.broadcast %422 : vector<1x128xf32> to vector<16x128xf32>
    %424 = arith.mulf %421, %423 : vector<16x128xf32>
    %425 = arith.addf %420, %424 : vector<16x128xf32>
    %c37_189 = arith.constant 37 : index
    %c0_190 = arith.constant 0 : index
    %426 = vector.load %arg4[%c37_189, %c0_190] : memref<45x128xf32, #tpu.memory_space<vmem>>, vector<1x128xf32>
    %427 = vector.broadcast %426 : vector<1x128xf32> to vector<16x128xf32>
    %428 = arith.mulf %242, %427 : vector<16x128xf32>
    %429 = arith.addf %425, %428 : vector<16x128xf32>
    %c127_i32_191 = arith.constant 127 : i32
    %430 = tpu.dynamic_rotate %242 by %c127_i32_191 dim 1 : vector<16x128xf32>, i32 -> vector<16x128xf32>
    %c38_192 = arith.constant 38 : index
    %c0_193 = arith.constant 0 : index
    %431 = vector.load %arg4[%c38_192, %c0_193] : memref<45x128xf32, #tpu.memory_space<vmem>>, vector<1x128xf32>
    %432 = vector.broadcast %431 : vector<1x128xf32> to vector<16x128xf32>
    %433 = arith.mulf %430, %432 : vector<16x128xf32>
    %434 = arith.addf %429, %433 : vector<16x128xf32>
    %c126_i32_194 = arith.constant 126 : i32
    %435 = tpu.dynamic_rotate %242 by %c126_i32_194 dim 1 : vector<16x128xf32>, i32 -> vector<16x128xf32>
    %c39_195 = arith.constant 39 : index
    %c0_196 = arith.constant 0 : index
    %436 = vector.load %arg4[%c39_195, %c0_196] : memref<45x128xf32, #tpu.memory_space<vmem>>, vector<1x128xf32>
    %437 = vector.broadcast %436 : vector<1x128xf32> to vector<16x128xf32>
    %438 = arith.mulf %435, %437 : vector<16x128xf32>
    %439 = arith.addf %434, %438 : vector<16x128xf32>
    %c125_i32_197 = arith.constant 125 : i32
    %440 = tpu.dynamic_rotate %242 by %c125_i32_197 dim 1 : vector<16x128xf32>, i32 -> vector<16x128xf32>
    %c40_198 = arith.constant 40 : index
    %c0_199 = arith.constant 0 : index
    %441 = vector.load %arg4[%c40_198, %c0_199] : memref<45x128xf32, #tpu.memory_space<vmem>>, vector<1x128xf32>
    %442 = vector.broadcast %441 : vector<1x128xf32> to vector<16x128xf32>
    %443 = arith.mulf %440, %442 : vector<16x128xf32>
    %444 = arith.addf %439, %443 : vector<16x128xf32>
    %c124_i32_200 = arith.constant 124 : i32
    %445 = tpu.dynamic_rotate %242 by %c124_i32_200 dim 1 : vector<16x128xf32>, i32 -> vector<16x128xf32>
    %c41_201 = arith.constant 41 : index
    %c0_202 = arith.constant 0 : index
    %446 = vector.load %arg4[%c41_201, %c0_202] : memref<45x128xf32, #tpu.memory_space<vmem>>, vector<1x128xf32>
    %447 = vector.broadcast %446 : vector<1x128xf32> to vector<16x128xf32>
    %448 = arith.mulf %445, %447 : vector<16x128xf32>
    %449 = arith.addf %444, %448 : vector<16x128xf32>
    %c123_i32_203 = arith.constant 123 : i32
    %450 = tpu.dynamic_rotate %242 by %c123_i32_203 dim 1 : vector<16x128xf32>, i32 -> vector<16x128xf32>
    %c42_204 = arith.constant 42 : index
    %c0_205 = arith.constant 0 : index
    %451 = vector.load %arg4[%c42_204, %c0_205] : memref<45x128xf32, #tpu.memory_space<vmem>>, vector<1x128xf32>
    %452 = vector.broadcast %451 : vector<1x128xf32> to vector<16x128xf32>
    %453 = arith.mulf %450, %452 : vector<16x128xf32>
    %454 = arith.addf %449, %453 : vector<16x128xf32>
    %c122_i32_206 = arith.constant 122 : i32
    %455 = tpu.dynamic_rotate %242 by %c122_i32_206 dim 1 : vector<16x128xf32>, i32 -> vector<16x128xf32>
    %c43_207 = arith.constant 43 : index
    %c0_208 = arith.constant 0 : index
    %456 = vector.load %arg4[%c43_207, %c0_208] : memref<45x128xf32, #tpu.memory_space<vmem>>, vector<1x128xf32>
    %457 = vector.broadcast %456 : vector<1x128xf32> to vector<16x128xf32>
    %458 = arith.mulf %455, %457 : vector<16x128xf32>
    %459 = arith.addf %454, %458 : vector<16x128xf32>
    %c121_i32_209 = arith.constant 121 : i32
    %460 = tpu.dynamic_rotate %242 by %c121_i32_209 dim 1 : vector<16x128xf32>, i32 -> vector<16x128xf32>
    %c44_210 = arith.constant 44 : index
    %c0_211 = arith.constant 0 : index
    %461 = vector.load %arg4[%c44_210, %c0_211] : memref<45x128xf32, #tpu.memory_space<vmem>>, vector<1x128xf32>
    %462 = vector.broadcast %461 : vector<1x128xf32> to vector<16x128xf32>
    %463 = arith.mulf %460, %462 : vector<16x128xf32>
    %464 = arith.addf %459, %463 : vector<16x128xf32>
    %cst_212 = arith.constant 0.000000e+00 : f32
    %465 = vector.broadcast %cst_212 : f32 to vector<16x128xf32>
    %466 = arith.maximumf %464, %465 : vector<16x128xf32>
    %c0_213 = arith.constant 0 : index
    %c0_214 = arith.constant 0 : index
    %c0_215 = arith.constant 0 : index
    %467 = vector.load %arg6[%c0_213, %c0_214, %c0_215] : memref<1x16x128xf32, #tpu.memory_space<vmem>>, vector<1x16x128xf32>
    %468 = vector.shape_cast %467 : vector<1x16x128xf32> to vector<16x128xf32>
    %469 = vector.shape_cast %466 : vector<16x128xf32> to vector<1x16x128xf32>
    tpu.vector_store %arg6[%c0_213, %c0_214, %c0_215], %469 {strides = array<i32>} : memref<1x16x128xf32, #tpu.memory_space<vmem>>, vector<1x16x128xf32>,
    return
  }
  func.func @transform_0(%arg0: i32) -> (i32, i32, i32) {
    %c0_i32 = arith.constant 0 : i32
    %c0_i32_0 = arith.constant 0 : i32
    %c0_i32_1 = arith.constant 0 : i32
    return %arg0, %c0_i32, %c0_i32_0 : i32, i32, i32
  }
  func.func @transform_1(%arg0: i32) -> (i32, i32) {
    %c0_i32 = arith.constant 0 : i32
    %c0_i32_0 = arith.constant 0 : i32
    %c0_i32_1 = arith.constant 0 : i32
    return %c0_i32, %c0_i32_0 : i32, i32
  }
  func.func @transform_2(%arg0: i32) -> (i32, i32) {
    %c0_i32 = arith.constant 0 : i32
    %c0_i32_0 = arith.constant 0 : i32
    %c0_i32_1 = arith.constant 0 : i32
    return %c0_i32, %c0_i32_0 : i32, i32
  }
  func.func @transform_3(%arg0: i32) -> (i32, i32) {
    %c0_i32 = arith.constant 0 : i32
    %c0_i32_0 = arith.constant 0 : i32
    %c0_i32_1 = arith.constant 0 : i32
    return %c0_i32, %c0_i32_0 : i32, i32
  }
  func.func @transform_4(%arg0: i32) -> (i32, i32) {
    %c0_i32 = arith.constant 0 : i32
    %c0_i32_0 = arith.constant 0 : i32
    %c0_i32_1 = arith.constant 0 : i32
    return %c0_i32, %c0_i32_0 : i32, i32
  }
  func.func @transform_5(%arg0: i32) -> (i32, i32, i32) {
    %c0_i32 = arith.constant 0 : i32
    %c0_i32_0 = arith.constant 0 : i32
    %c0_i32_1 = arith.constant 0 : i32
    return %arg0, %c0_i32, %c0_i32_0 : i32, i32, i32
  }
}

</mosaic_0001>

<llo_original>
// kernel: tile.21
$region0: #{tile.21}
  %s0 = inlined_call_operand.vmem [shape: f32[3,1,15,2,64], index: 0, kind: input, shape index: {}]
  %s1 = inlined_call_operand.vmem [shape: f32[45,128], index: 1, kind: output, shape index: {}]
  $region1: #{tile.21} parent=0
    #allocation0 [shape = 'u8[184320]{0}', space=vmem, size = 0x2d000, scoped, tag = 'scoped mem for input reshape']
    %s3 = sshllo.u32 0, 2
    %s4 = smul.addr 2, 44
    %s5 = scalar_lea.vmem %s0, %s4
    %v6 = vld [vmem:[%s5] sm:%s3]
    %s7 = scalar_lea.vmem [#allocation0], 352
    %8 = vst [vmem:[%s7] sm:%s3] %v6
    %s9 = smul.addr 2, 43
    %s10 = scalar_lea.vmem %s0, %s9
    %v11 = vld [vmem:[%s10] sm:%s3]
    %s12 = scalar_lea.vmem [#allocation0], 344
    %13 = vst [vmem:[%s12] sm:%s3] %v11
    %s14 = smul.addr 2, 42
    %s15 = scalar_lea.vmem %s0, %s14
    %v16 = vld [vmem:[%s15] sm:%s3]
    %s17 = scalar_lea.vmem [#allocation0], 336
    %18 = vst [vmem:[%s17] sm:%s3] %v16
    %s19 = smul.addr 2, 41
    %s20 = scalar_lea.vmem %s0, %s19
    %v21 = vld [vmem:[%s20] sm:%s3]
    %s22 = scalar_lea.vmem [#allocation0], 328
    %23 = vst [vmem:[%s22] sm:%s3] %v21
    %s24 = smul.addr 2, 40
    %s25 = scalar_lea.vmem %s0, %s24
    %v26 = vld [vmem:[%s25] sm:%s3]
    %s27 = scalar_lea.vmem [#allocation0], 320
    %28 = vst [vmem:[%s27] sm:%s3] %v26
    %s29 = smul.addr 2, 39
    %s30 = scalar_lea.vmem %s0, %s29
    %v31 = vld [vmem:[%s30] sm:%s3]
    %s32 = scalar_lea.vmem [#allocation0], 312
    %33 = vst [vmem:[%s32] sm:%s3] %v31
    %s34 = smul.addr 2, 38
    %s35 = scalar_lea.vmem %s0, %s34
    %v36 = vld [vmem:[%s35] sm:%s3]
    %s37 = scalar_lea.vmem [#allocation0], 304
    %38 = vst [vmem:[%s37] sm:%s3] %v36
    %s39 = smul.addr 2, 37
    %s40 = scalar_lea.vmem %s0, %s39
    %v41 = vld [vmem:[%s40] sm:%s3]
    %s42 = scalar_lea.vmem [#allocation0], 296
    %43 = vst [vmem:[%s42] sm:%s3] %v41
    %s44 = smul.addr 2, 36
    %s45 = scalar_lea.vmem %s0, %s44
    %v46 = vld [vmem:[%s45] sm:%s3]
    %s47 = scalar_lea.vmem [#allocation0], 288
    %48 = vst [vmem:[%s47] sm:%s3] %v46
    %s49 = smul.addr 2, 35
    %s50 = scalar_lea.vmem %s0, %s49
    %v51 = vld [vmem:[%s50] sm:%s3]
    %s52 = scalar_lea.vmem [#allocation0], 280
    %53 = vst [vmem:[%s52] sm:%s3] %v51
    %s54 = smul.addr 2, 34
    %s55 = scalar_lea.vmem %s0, %s54
    %v56 = vld [vmem:[%s55] sm:%s3]
    %s57 = scalar_lea.vmem [#allocation0], 272
    %58 = vst [vmem:[%s57] sm:%s3] %v56
    %s59 = smul.addr 2, 33
    %s60 = scalar_lea.vmem %s0, %s59
    %v61 = vld [vmem:[%s60] sm:%s3]
    %s62 = scalar_lea.vmem [#allocation0], 264
    %63 = vst [vmem:[%s62] sm:%s3] %v61
    %s64 = smul.addr 2, 32
    %s65 = scalar_lea.vmem %s0, %s64
    %v66 = vld [vmem:[%s65] sm:%s3]
    %s67 = scalar_lea.vmem [#allocation0], 256
    %68 = vst [vmem:[%s67] sm:%s3] %v66
    %s69 = smul.addr 2, 31
    %s70 = scalar_lea.vmem %s0, %s69
    %v71 = vld [vmem:[%s70] sm:%s3]
    %s72 = scalar_lea.vmem [#allocation0], 248
    %73 = vst [vmem:[%s72] sm:%s3] %v71
    %s74 = smul.addr 2, 30
    %s75 = scalar_lea.vmem %s0, %s74
    %v76 = vld [vmem:[%s75] sm:%s3]
    %s77 = scalar_lea.vmem [#allocation0], 240
    %78 = vst [vmem:[%s77] sm:%s3] %v76
    %s79 = smul.addr 2, 29
    %s80 = scalar_lea.vmem %s0, %s79
    %v81 = vld [vmem:[%s80] sm:%s3]
    %s82 = scalar_lea.vmem [#allocation0], 232
    %83 = vst [vmem:[%s82] sm:%s3] %v81
    %s84 = smul.addr 2, 28
    %s85 = scalar_lea.vmem %s0, %s84
    %v86 = vld [vmem:[%s85] sm:%s3]
    %s87 = scalar_lea.vmem [#allocation0], 224
    %88 = vst [vmem:[%s87] sm:%s3] %v86
    %s89 = smul.addr 2, 27
    %s90 = scalar_lea.vmem %s0, %s89
    %v91 = vld [vmem:[%s90] sm:%s3]
    %s92 = scalar_lea.vmem [#allocation0], 216
    %93 = vst [vmem:[%s92] sm:%s3] %v91
    %s94 = smul.addr 2, 26
    %s95 = scalar_lea.vmem %s0, %s94
    %v96 = vld [vmem:[%s95] sm:%s3]
    %s97 = scalar_lea.vmem [#allocation0], 208
    %98 = vst [vmem:[%s97] sm:%s3] %v96
    %s99 = smul.addr 2, 25
    %s100 = scalar_lea.vmem %s0, %s99
    %v101 = vld [vmem:[%s100] sm:%s3]
    %s102 = scalar_lea.vmem [#allocation0], 200
    %103 = vst [vmem:[%s102] sm:%s3] %v101
    %s104 = smul.addr 2, 24
    %s105 = scalar_lea.vmem %s0, %s104
    %v106 = vld [vmem:[%s105] sm:%s3]
    %s107 = scalar_lea.vmem [#allocation0], 192
    %108 = vst [vmem:[%s107] sm:%s3] %v106
    %s109 = smul.addr 2, 23
    %s110 = scalar_lea.vmem %s0, %s109
    %v111 = vld [vmem:[%s110] sm:%s3]
    %s112 = scalar_lea.vmem [#allocation0], 184
    %113 = vst [vmem:[%s112] sm:%s3] %v111
    %s114 = smul.addr 2, 22
    %s115 = scalar_lea.vmem %s0, %s114
    %v116 = vld [vmem:[%s115] sm:%s3]
    %s117 = scalar_lea.vmem [#allocation0], 176
    %118 = vst [vmem:[%s117] sm:%s3] %v116
    %s119 = smul.addr 2, 21
    %s120 = scalar_lea.vmem %s0, %s119
    %v121 = vld [vmem:[%s120] sm:%s3]
    %s122 = scalar_lea.vmem [#allocation0], 168
    %123 = vst [vmem:[%s122] sm:%s3] %v121
    %s124 = smul.addr 2, 20
    %s125 = scalar_lea.vmem %s0, %s124
    %v126 = vld [vmem:[%s125] sm:%s3]
    %s127 = scalar_lea.vmem [#allocation0], 160
    %128 = vst [vmem:[%s127] sm:%s3] %v126
    %s129 = smul.addr 2, 19
    %s130 = scalar_lea.vmem %s0, %s129
    %v131 = vld [vmem:[%s130] sm:%s3]
    %s132 = scalar_lea.vmem [#allocation0], 152
    %133 = vst [vmem:[%s132] sm:%s3] %v131
    %s134 = smul.addr 2, 18
    %s135 = scalar_lea.vmem %s0, %s134
    %v136 = vld [vmem:[%s135] sm:%s3]
    %s137 = scalar_lea.vmem [#allocation0], 144
    %138 = vst [vmem:[%s137] sm:%s3] %v136
    %s139 = smul.addr 2, 17
    %s140 = scalar_lea.vmem %s0, %s139
    %v141 = vld [vmem:[%s140] sm:%s3]
    %s142 = scalar_lea.vmem [#allocation0], 136
    %143 = vst [vmem:[%s142] sm:%s3] %v141
    %s144 = smul.addr 2, 16
    %s145 = scalar_lea.vmem %s0, %s144
    %v146 = vld [vmem:[%s145] sm:%s3]
    %s147 = scalar_lea.vmem [#allocation0], 128
    %148 = vst [vmem:[%s147] sm:%s3] %v146
    %s149 = smul.addr 2, 15
    %s150 = scalar_lea.vmem %s0, %s149
    %v151 = vld [vmem:[%s150] sm:%s3]
    %s152 = scalar_lea.vmem [#allocation0], 120
    %153 = vst [vmem:[%s152] sm:%s3] %v151
    %s154 = smul.addr 2, 14
    %s155 = scalar_lea.vmem %s0, %s154
    %v156 = vld [vmem:[%s155] sm:%s3]
    %s157 = scalar_lea.vmem [#allocation0], 112
    %158 = vst [vmem:[%s157] sm:%s3] %v156
    %s159 = smul.addr 2, 13
    %s160 = scalar_lea.vmem %s0, %s159
    %v161 = vld [vmem:[%s160] sm:%s3]
    %s162 = scalar_lea.vmem [#allocation0], 104
    %163 = vst [vmem:[%s162] sm:%s3] %v161
    %s164 = smul.addr 2, 12
    %s165 = scalar_lea.vmem %s0, %s164
    %v166 = vld [vmem:[%s165] sm:%s3]
    %s167 = scalar_lea.vmem [#allocation0], 96
    %168 = vst [vmem:[%s167] sm:%s3] %v166
    %s169 = smul.addr 2, 11
    %s170 = scalar_lea.vmem %s0, %s169
    %v171 = vld [vmem:[%s170] sm:%s3]
    %s172 = scalar_lea.vmem [#allocation0], 88
    %173 = vst [vmem:[%s172] sm:%s3] %v171
    %s174 = smul.addr 2, 10
    %s175 = scalar_lea.vmem %s0, %s174
    %v176 = vld [vmem:[%s175] sm:%s3]
    %s177 = scalar_lea.vmem [#allocation0], 80
    %178 = vst [vmem:[%s177] sm:%s3] %v176
    %s179 = smul.addr 2, 9
    %s180 = scalar_lea.vmem %s0, %s179
    %v181 = vld [vmem:[%s180] sm:%s3]
    %s182 = scalar_lea.vmem [#allocation0], 72
    %183 = vst [vmem:[%s182] sm:%s3] %v181
    %s184 = smul.addr 2, 8
    %s185 = scalar_lea.vmem %s0, %s184
    %v186 = vld [vmem:[%s185] sm:%s3]
    %s187 = scalar_lea.vmem [#allocation0], 64
    %188 = vst [vmem:[%s187] sm:%s3] %v186
    %s189 = smul.addr 2, 7
    %s190 = scalar_lea.vmem %s0, %s189
    %v191 = vld [vmem:[%s190] sm:%s3]
    %s192 = scalar_lea.vmem [#allocation0], 56
    %193 = vst [vmem:[%s192] sm:%s3] %v191
    %s194 = smul.addr 2, 6
    %s195 = scalar_lea.vmem %s0, %s194
    %v196 = vld [vmem:[%s195] sm:%s3]
    %s197 = scalar_lea.vmem [#allocation0], 48
    %198 = vst [vmem:[%s197] sm:%s3] %v196
    %s199 = smul.addr 2, 5
    %s200 = scalar_lea.vmem %s0, %s199
    %v201 = vld [vmem:[%s200] sm:%s3]
    %s202 = scalar_lea.vmem [#allocation0], 40
    %203 = vst [vmem:[%s202] sm:%s3] %v201
    %s204 = smul.addr 2, 4
    %s205 = scalar_lea.vmem %s0, %s204
    %v206 = vld [vmem:[%s205] sm:%s3]
    %s207 = scalar_lea.vmem [#allocation0], 32
    %208 = vst [vmem:[%s207] sm:%s3] %v206
    %s209 = smul.addr 2, 3
    %s210 = scalar_lea.vmem %s0, %s209
    %v211 = vld [vmem:[%s210] sm:%s3]
    %s212 = scalar_lea.vmem [#allocation0], 24
    %213 = vst [vmem:[%s212] sm:%s3] %v211
    %s214 = smul.addr 2, 2
    %s215 = scalar_lea.vmem %s0, %s214
    %v216 = vld [vmem:[%s215] sm:%s3]
    %s217 = scalar_lea.vmem [#allocation0], 16
    %218 = vst [vmem:[%s217] sm:%s3] %v216
    %s219 = scalar_lea.vmem %s0, 2
    %v220 = vld [vmem:[%s219] sm:%s3]
    %s221 = scalar_lea.vmem [#allocation0], 8
    %222 = vst [vmem:[%s221] sm:%s3] %v220
    %v223 = vld [vmem:[%s0] sm:%s3]
    %224 = vst [vmem:[#allocation0] sm:%s3] %v223
    %v225 = vld [vmem:[#allocation0] ss:$8 sm:$0xf]
    %v226 = vld [vmem:[#allocation0] ss:$8 sm:$0xf0]
    %vm227 = vcmask 1047556
    %v228 = vsel %vm227, %v226, %v225
    %vm229 = vcmask 523264
    %230 = vst.msk [vmem:[%s1] sm:$0xff] %vm229, %v228
    %s231 = scalar_lea.vmem [#allocation0], 64
    %v232 = vld [vmem:[%s231] ss:$8 sm:$0xf]
    %s233 = scalar_lea.vmem [#allocation0], 64
    %v234 = vld [vmem:[%s233] ss:$8 sm:$0xf0]
    %vm235 = vcmask 1047556
    %v236 = vsel %vm235, %v234, %v232
    %vm237 = vcmask 523264
    %s238 = scalar_lea.vmem %s1, 8
    %239 = vst.msk [vmem:[%s238] sm:$0xff] %vm237, %v236
    %s240 = scalar_lea.vmem [#allocation0], 128
    %v241 = vld [vmem:[%s240] ss:$8 sm:$0xf]
    %s242 = scalar_lea.vmem [#allocation0], 128
    %v243 = vld [vmem:[%s242] ss:$8 sm:$0xf0]
    %vm244 = vcmask 1047556
    %v245 = vsel %vm244, %v243, %v241
    %vm246 = vcmask 523264
    %s247 = scalar_lea.vmem %s1, 16
    %248 = vst.msk [vmem:[%s247] sm:$0xff] %vm246, %v245
    %s249 = scalar_lea.vmem [#allocation0], 192
    %v250 = vld [vmem:[%s249] ss:$8 sm:$0xf]
    %s251 = scalar_lea.vmem [#allocation0], 192
    %v252 = vld [vmem:[%s251] ss:$8 sm:$0xf0]
    %vm253 = vcmask 1047556
    %v254 = vsel %vm253, %v252, %v250
    %vm255 = vcmask 523264
    %s256 = scalar_lea.vmem %s1, 24
    %257 = vst.msk [vmem:[%s256] sm:$0xff] %vm255, %v254
    %s258 = scalar_lea.vmem [#allocation0], 256
    %v259 = vld [vmem:[%s258] ss:$8 sm:$0xf]
    %s260 = scalar_lea.vmem [#allocation0], 256
    %v261 = vld [vmem:[%s260] ss:$8 sm:$0xf0]
    %vm262 = vcmask 1047556
    %v263 = vsel %vm262, %v261, %v259
    %vm264 = vcmask 523264
    %s265 = scalar_lea.vmem %s1, 32
    %266 = vst.msk [vmem:[%s265] sm:$0xff] %vm264, %v263
    %s267 = scalar_lea.vmem [#allocation0], 320
    %v268 = vld [vmem:[%s267] ss:$8 sm:$0xf]
    %s269 = scalar_lea.vmem [#allocation0], 348
    %v270 = vld [vmem:[%s269] sm:$0x10]
    %vm271 = vcmask 1044484
    %v272 = vsel %vm271, %v270, %v268
    %vm273 = vcmask 523264
    %s274 = scalar_lea.vmem %s1, 40
    %275 = vst.msk [vmem:[%s274] sm:$0x1f] %vm273, %v272
    %s276 = scalar_lea.vmem [#allocation0], 1
    %v277 = vld [vmem:[%s276] ss:$8 sm:$0xf]
    %s278 = scalar_lea.vmem [#allocation0], 1
    %v279 = vld [vmem:[%s278] ss:$8 sm:$0xf0]
    %vm280 = vcmask 1047556
    %v281 = vsel %vm280, %v279, %v277
    %282 = vrot.lane.b32.xlu0 %v281, 64
    %v283 = vpop.permute.xlu0 %282
    %vm284 = vcmask 1048064
    %285 = vst.msk [vmem:[%s1] sm:$0xff] %vm284, %v283
    %s286 = scalar_lea.vmem [#allocation0], 257
    %v287 = vld [vmem:[%s286] ss:$8 sm:$0xf]
    %s288 = scalar_lea.vmem [#allocation0], 257
    %v289 = vld [vmem:[%s288] ss:$8 sm:$0xf0]
    %vm290 = vcmask 1047556
    %v291 = vsel %vm290, %v289, %v287
    %292 = vrot.lane.b32.xlu0 %v291, 64
    %v293 = vpop.permute.xlu0 %292
    %vm294 = vcmask 1048064
    %s295 = scalar_lea.vmem %s1, 32
    %296 = vst.msk [vmem:[%s295] sm:$0xff] %vm294, %v293
    %s297 = scalar_lea.vmem [#allocation0], 65
    %v298 = vld [vmem:[%s297] ss:$8 sm:$0xf]
    %s299 = scalar_lea.vmem [#allocation0], 65
    %v300 = vld [vmem:[%s299] ss:$8 sm:$0xf0]
    %vm301 = vcmask 1047556
    %v302 = vsel %vm301, %v300, %v298
    %303 = vrot.lane.b32.xlu0 %v302, 64
    %v304 = vpop.permute.xlu0 %303
    %vm305 = vcmask 1048064
    %s306 = scalar_lea.vmem %s1, 8
    %307 = vst.msk [vmem:[%s306] sm:$0xff] %vm305, %v304
    %s308 = scalar_lea.vmem [#allocation0], 321
    %v309 = vld [vmem:[%s308] ss:$8 sm:$0xf]
    %s310 = scalar_lea.vmem [#allocation0], 349
    %v311 = vld [vmem:[%s310] sm:$0x10]
    %vm312 = vcmask 1044484
    %v313 = vsel %vm312, %v311, %v309
    %s314 = scalar_lea.vmem [#allocation0], 89
    %v315 = vld [vmem:[%s314] ss:$8 sm:$0xe0]
    %vm316 = vcmask 1047557
    %v317 = vsel %vm316, %v315, %v313
    %318 = vrot.lane.b32.xlu0 %v317, 64
    %v319 = vpop.permute.xlu0 %318
    %vm320 = vcmask 1048064
    %s321 = scalar_lea.vmem %s1, 40
    %322 = vst.msk [vmem:[%s321] sm:$0x1f] %vm320, %v319
    %s323 = scalar_lea.vmem %s1, 11
    %324 = vst.msk [vmem:[%s323] sm:$0xe0] %vm320, %v319
    %s325 = scalar_lea.vmem [#allocation0], 153
    %v326 = vld [vmem:[%s325] ss:$8 sm:$0xf]
    %s327 = scalar_lea.vmem [#allocation0], 153
    %v328 = vld [vmem:[%s327] ss:$8 sm:$0xf0]
    %vm329 = vcmask 1047556
    %v330 = vsel %vm329, %v328, %v326
    %331 = vrot.lane.b32.xlu0 %v330, 64
    %v332 = vpop.permute.xlu0 %331
    %vm333 = vcmask 1048064
    %s334 = scalar_lea.vmem %s1, 19
    %335 = vst.msk [vmem:[%s334] sm:$0xff] %vm333, %v332
    %s336 = scalar_lea.vmem [#allocation0], 217
    %v337 = vld [vmem:[%s336] ss:$8 sm:$0xf]
    %s338 = scalar_lea.vmem [#allocation0], 245
    %v339 = vld [vmem:[%s338] sm:$0x10]
    %vm340 = vcmask 1044484
    %v341 = vsel %vm340, %v339, %v337
    %342 = vrot.lane.b32.xlu0 %v341, 64
    %v343 = vpop.permute.xlu0 %342
    %vm344 = vcmask 1048064
    %s345 = scalar_lea.vmem %s1, 27
    %346 = vst.msk [vmem:[%s345] sm:$0x1f] %vm344, %v343

// kernel: tile.29
$region0: #{tile.29}
  #allocation0 [shape = 's32[1]{0}', space=sflag, size = 0x4, scoped, tag = 'scoped memory for tile.29']
  %s0 = inlined_call_operand.vmem [shape: f32[4], index: 0, kind: input, shape index: {}]
  %s1 = inlined_call_operand.vmem [shape: f32[32,4], index: 1, kind: output, shape index: {}]
  // Predicated region
  $region2: #{tile.29} parent=0 // pred_check
    _
  $region3: #{tile.29} parent=0 // pred_check_branch
    %3 = sbr.rel (0) target = $region5
  $region4: #{tile.29} parent=0 // pred_region
    _
  $region5: #{tile.29} parent=0 // pred_fallthru
    _
  %v4 = vld [vmem:[%s0] ss:$0 sm:$0xff]
  %5 = vst [vmem:[%s1] sm:$0xff] %v4
  %s6 = scalar_lea.vmem %s1, 8
  %7 = vst [vmem:[%s6] sm:$0xff] %v4
  %s8 = scalar_lea.vmem %s1, 16
  %9 = vst [vmem:[%s8] sm:$0xff] %v4
  %s10 = scalar_lea.vmem %s1, 24
  %11 = vst [vmem:[%s10] sm:$0xff] %v4

// kernel: tile.30
$region0: #{tile.30}
  %s0 = inlined_call_operand.vmem [shape: f32[32,4], index: 0, kind: input, shape index: {}]
  %s1 = inlined_call_operand.vmem [shape: f32[1,128], index: 1, kind: output, shape index: {}]
  $region1: #{tile.30} parent=0
    #allocation0 [shape = 'u8[4096]{0}', space=vmem, size = 0x1000, scoped, tag = 'scoped mem for output reshape']
    %v2 = vld [vmem:[%s0] sm:$0x1]
    %vm3 = vcmask 31744
    %4 = vst.msk [vmem:[#allocation0] sm:$0x1] %vm3, %v2
    %s5 = scalar_lea.vmem %s0, 31
    %v6 = vld [vmem:[%s5] sm:$0x1]
    %7 = vrot.lane.b32.xlu0 %v6, 124
    %v8 = vpop.permute.xlu0 %7
    %vm9 = vcmask 1048544
    %10 = vst.msk [vmem:[#allocation0] sm:$0x1] %vm9, %v8
    %s11 = scalar_lea.vmem %s0, 30
    %v12 = vld [vmem:[%s11] sm:$0x1]
    %13 = vrot.lane.b32.xlu0 %v12, 120
    %v14 = vpop.permute.xlu0 %13
    %vm15 = vcmask 1015744
    %16 = vst.msk [vmem:[#allocation0] sm:$0x1] %vm15, %v14
    %s17 = scalar_lea.vmem %s0, 29
    %v18 = vld [vmem:[%s17] sm:$0x1]
    %19 = vrot.lane.b32.xlu0 %v18, 116
    %v20 = vpop.permute.xlu0 %19
    %vm21 = vcmask 982944
    %22 = vst.msk [vmem:[#allocation0] sm:$0x1] %vm21, %v20
    %s23 = scalar_lea.vmem %s0, 28
    %v24 = vld [vmem:[%s23] sm:$0x1]
    %25 = vrot.lane.b32.xlu0 %v24, 112
    %v26 = vpop.permute.xlu0 %25
    %vm27 = vcmask 950144
    %28 = vst.msk [vmem:[#allocation0] sm:$0x1] %vm27, %v26
    %s29 = scalar_lea.vmem %s0, 27
    %v30 = vld [vmem:[%s29] sm:$0x1]
    %31 = vrot.lane.b32.xlu0 %v30, 108
    %v32 = vpop.permute.xlu0 %31
    %vm33 = vcmask 917344
    %34 = vst.msk [vmem:[#allocation0] sm:$0x1] %vm33, %v32
    %s35 = scalar_lea.vmem %s0, 26
    %v36 = vld [vmem:[%s35] sm:$0x1]
    %37 = vrot.lane.b32.xlu0 %v36, 104
    %v38 = vpop.permute.xlu0 %37
    %vm39 = vcmask 884544
    %40 = vst.msk [vmem:[#allocation0] sm:$0x1] %vm39, %v38
    %s41 = scalar_lea.vmem %s0, 25
    %v42 = vld [vmem:[%s41] sm:$0x1]
    %43 = vrot.lane.b32.xlu0 %v42, 100
    %v44 = vpop.permute.xlu0 %43
    %vm45 = vcmask 851744
    %46 = vst.msk [vmem:[#allocation0] sm:$0x1] %vm45, %v44
    %s47 = scalar_lea.vmem %s0, 24
    %v48 = vld [vmem:[%s47] sm:$0x1]
    %49 = vrot.lane.b32.xlu0 %v48, 96
    %v50 = vpop.permute.xlu0 %49
    %vm51 = vcmask 818944
    %52 = vst.msk [vmem:[#allocation0] sm:$0x1] %vm51, %v50
    %s53 = scalar_lea.vmem %s0, 23
    %v54 = vld [vmem:[%s53] sm:$0x1]
    %55 = vrot.lane.b32.xlu0 %v54, 92
    %v56 = vpop.permute.xlu0 %55
    %vm57 = vcmask 786144
    %58 = vst.msk [vmem:[#allocation0] sm:$0x1] %vm57, %v56
    %s59 = scalar_lea.vmem %s0, 22
    %v60 = vld [vmem:[%s59] sm:$0x1]
    %61 = vrot.lane.b32.xlu0 %v60, 88
    %v62 = vpop.permute.xlu0 %61
    %vm63 = vcmask 753344
    %64 = vst.msk [vmem:[#allocation0] sm:$0x1] %vm63, %v62
    %s65 = scalar_lea.vmem %s0, 21
    %v66 = vld [vmem:[%s65] sm:$0x1]
    %67 = vrot.lane.b32.xlu0 %v66, 84
    %v68 = vpop.permute.xlu0 %67
    %vm69 = vcmask 720544
    %70 = vst.msk [vmem:[#allocation0] sm:$0x1] %vm69, %v68
    %s71 = scalar_lea.vmem %s0, 20
    %v72 = vld [vmem:[%s71] sm:$0x1]
    %73 = vrot.lane.b32.xlu0 %v72, 80
    %v74 = vpop.permute.xlu0 %73
    %vm75 = vcmask 687744
    %76 = vst.msk [vmem:[#allocation0] sm:$0x1] %vm75, %v74
    %s77 = scalar_lea.vmem %s0, 19
    %v78 = vld [vmem:[%s77] sm:$0x1]
    %79 = vrot.lane.b32.xlu0 %v78, 76
    %v80 = vpop.permute.xlu0 %79
    %vm81 = vcmask 654944
    %82 = vst.msk [vmem:[#allocation0] sm:$0x1] %vm81, %v80
    %s83 = scalar_lea.vmem %s0, 18
    %v84 = vld [vmem:[%s83] sm:$0x1]
    %85 = vrot.lane.b32.xlu0 %v84, 72
    %v86 = vpop.permute.xlu0 %85
    %vm87 = vcmask 622144
    %88 = vst.msk [vmem:[#allocation0] sm:$0x1] %vm87, %v86
    %s89 = scalar_lea.vmem %s0, 17
    %v90 = vld [vmem:[%s89] sm:$0x1]
    %91 = vrot.lane.b32.xlu0 %v90, 68
    %v92 = vpop.permute.xlu0 %91
    %vm93 = vcmask 589344
    %94 = vst.msk [vmem:[#allocation0] sm:$0x1] %vm93, %v92
    %s95 = scalar_lea.vmem %s0, 16
    %v96 = vld [vmem:[%s95] sm:$0x1]
    %97 = vrot.lane.b32.xlu0 %v96, 64
    %v98 = vpop.permute.xlu0 %97
    %vm99 = vcmask 556544
    %100 = vst.msk [vmem:[#allocation0] sm:$0x1] %vm99, %v98
    %s101 = scalar_lea.vmem %s0, 15
    %v102 = vld [vmem:[%s101] sm:$0x1]
    %103 = vrot.lane.b32.xlu0 %v102, 60
    %v104 = vpop.permute.xlu0 %103
    %vm105 = vcmask 523744
    %106 = vst.msk [vmem:[#allocation0] sm:$0x1] %vm105, %v104
    %s107 = scalar_lea.vmem %s0, 14
    %v108 = vld [vmem:[%s107] sm:$0x1]
    %109 = vrot.lane.b32.xlu0 %v108, 56
    %v110 = vpop.permute.xlu0 %109
    %vm111 = vcmask 490944
    %112 = vst.msk [vmem:[#allocation0] sm:$0x1] %vm111, %v110
    %s113 = scalar_lea.vmem %s0, 13
    %v114 = vld [vmem:[%s113] sm:$0x1]
    %115 = vrot.lane.b32.xlu0 %v114, 52
    %v116 = vpop.permute.xlu0 %115
    %vm117 = vcmask 458144
    %118 = vst.msk [vmem:[#allocation0] sm:$0x1] %vm117, %v116
    %s119 = scalar_lea.vmem %s0, 12
    %v120 = vld [vmem:[%s119] sm:$0x1]
    %121 = vrot.lane.b32.xlu0 %v120, 48
    %v122 = vpop.permute.xlu0 %121
    %vm123 = vcmask 425344
    %124 = vst.msk [vmem:[#allocation0] sm:$0x1] %vm123, %v122
    %s125 = scalar_lea.vmem %s0, 11
    %v126 = vld [vmem:[%s125] sm:$0x1]
    %127 = vrot.lane.b32.xlu0 %v126, 44
    %v128 = vpop.permute.xlu0 %127
    %vm129 = vcmask 392544
    %130 = vst.msk [vmem:[#allocation0] sm:$0x1] %vm129, %v128
    %s131 = scalar_lea.vmem %s0, 10
    %v132 = vld [vmem:[%s131] sm:$0x1]
    %133 = vrot.lane.b32.xlu0 %v132, 40
    %v134 = vpop.permute.xlu0 %133
    %vm135 = vcmask 359744
    %136 = vst.msk [vmem:[#allocation0] sm:$0x1] %vm135, %v134
    %s137 = scalar_lea.vmem %s0, 9
    %v138 = vld [vmem:[%s137] sm:$0x1]
    %139 = vrot.lane.b32.xlu0 %v138, 36
    %v140 = vpop.permute.xlu0 %139
    %vm141 = vcmask 326944
    %142 = vst.msk [vmem:[#allocation0] sm:$0x1] %vm141, %v140
    %s143 = scalar_lea.vmem %s0, 8
    %v144 = vld [vmem:[%s143] sm:$0x1]
    %145 = vrot.lane.b32.xlu0 %v144, 32
    %v146 = vpop.permute.xlu0 %145
    %vm147 = vcmask 294144
    %148 = vst.msk [vmem:[#allocation0] sm:$0x1] %vm147, %v146
    %s149 = scalar_lea.vmem %s0, 7
    %v150 = vld [vmem:[%s149] sm:$0x1]
    %151 = vrot.lane.b32.xlu0 %v150, 28
    %v152 = vpop.permute.xlu0 %151
    %vm153 = vcmask 261344
    %154 = vst.msk [vmem:[#allocation0] sm:$0x1] %vm153, %v152
    %s155 = scalar_lea.vmem %s0, 6
    %v156 = vld [vmem:[%s155] sm:$0x1]
    %157 = vrot.lane.b32.xlu0 %v156, 24
    %v158 = vpop.permute.xlu0 %157
    %vm159 = vcmask 228544
    %160 = vst.msk [vmem:[#allocation0] sm:$0x1] %vm159, %v158
    %s161 = scalar_lea.vmem %s0, 5
    %v162 = vld [vmem:[%s161] sm:$0x1]
    %163 = vrot.lane.b32.xlu0 %v162, 20
    %v164 = vpop.permute.xlu0 %163
    %vm165 = vcmask 195744
    %166 = vst.msk [vmem:[#allocation0] sm:$0x1] %vm165, %v164
    %s167 = scalar_lea.vmem %s0, 4
    %v168 = vld [vmem:[%s167] sm:$0x1]
    %169 = vrot.lane.b32.xlu0 %v168, 16
    %v170 = vpop.permute.xlu0 %169
    %vm171 = vcmask 162944
    %172 = vst.msk [vmem:[#allocation0] sm:$0x1] %vm171, %v170
    %s173 = scalar_lea.vmem %s0, 3
    %v174 = vld [vmem:[%s173] sm:$0x1]
    %175 = vrot.lane.b32.xlu0 %v174, 12
    %v176 = vpop.permute.xlu0 %175
    %vm177 = vcmask 130144
    %178 = vst.msk [vmem:[#allocation0] sm:$0x1] %vm177, %v176
    %s179 = scalar_lea.vmem %s0, 2
    %v180 = vld [vmem:[%s179] sm:$0x1]
    %181 = vrot.lane.b32.xlu0 %v180, 8
    %v182 = vpop.permute.xlu0 %181
    %vm183 = vcmask 97344
    %184 = vst.msk [vmem:[#allocation0] sm:$0x1] %vm183, %v182
    %s185 = scalar_lea.vmem %s0, 1
    %v186 = vld [vmem:[%s185] sm:$0x1]
    %187 = vrot.lane.b32.xlu0 %v186, 4
    %v188 = vpop.permute.xlu0 %187
    %vm189 = vcmask 64544
    %190 = vst.msk [vmem:[#allocation0] sm:$0x1] %vm189, %v188
    %s192 = sshllo.u32 0, 1
    %v194 = vld [vmem:[#allocation0] sm:%s192]
    %s195 = sshllo.u32 0, 1
    %196 = vst [vmem:[%s1] sm:%s195] %v194

// kernel: basic_block_forward.1
$region0: #{basic_block_forward.1}
  #allocation0 [shape = 'u32[]', space=smem, size = 0x4, offset = 0x4, fixed_abs, tag = 'smem constant byte address 0x4 - core index']
  #allocation1 [shape = 'u32[144,128]{1,0:T(1,128)}', space=vmem, size = 0x12000, scoped, tag = 'internal scratch']
  %s0 = inlined_call_operand.vmem [shape: f32[1,16,128], index: 0, kind: input, shape index: {}]
  %s1 = inlined_call_operand.vmem [shape: f32[45,128], index: 1, kind: input, shape index: {}]
  %s2 = inlined_call_operand.vmem [shape: f32[1,128], index: 2, kind: input, shape index: {}]
  %s3 = inlined_call_operand.vmem [shape: f32[45,128], index: 3, kind: input, shape index: {}]
  %s4 = inlined_call_operand.vmem [shape: f32[1,128], index: 4, kind: input, shape index: {}]
  %s5 = inlined_call_operand.vmem [shape: f32[1,16,128], index: 5, kind: output, shape index: {}]
  %s6 = sld [smem:[#allocation0]]
  $region30: #{basic_block_forward.1} parent=0
    _
  %s8 = ssub.s32 1, %s6
  %s9 = scalar_select 0, %s8, %s6
  // Predicated region
  $region2: #{basic_block_forward.1} parent=0 // pred_check
    _
  $region3: #{basic_block_forward.1} parent=0 // pred_check_branch
    %11 = sbr.rel (0) target = $region5
  $region4: #{basic_block_forward.1} parent=0 // pred_region
    _
  $region5: #{basic_block_forward.1} parent=0 // pred_fallthru
    _
  // Predicated region
  $region6: #{basic_block_forward.1} parent=0 // pred_check
    _
  $region7: #{basic_block_forward.1} parent=0 // pred_check_branch
    %13 = sbr.rel (0) target = $region9
  $region8: #{basic_block_forward.1} parent=0 // pred_region
    _
  $region9: #{basic_block_forward.1} parent=0 // pred_fallthru
    _
  // Predicated region
  $region10: #{basic_block_forward.1} parent=0 // pred_check
    _
  $region11: #{basic_block_forward.1} parent=0 // pred_check_branch
    %15 = sbr.rel (0) target = $region13
  $region12: #{basic_block_forward.1} parent=0 // pred_region
    _
  $region13: #{basic_block_forward.1} parent=0 // pred_fallthru
    _
  // Predicated region
  $region14: #{basic_block_forward.1} parent=0 // pred_check
    _
  $region15: #{basic_block_forward.1} parent=0 // pred_check_branch
    %17 = sbr.rel (0) target = $region17
  $region16: #{basic_block_forward.1} parent=0 // pred_region
    _
  $region17: #{basic_block_forward.1} parent=0 // pred_fallthru
    _
  // Predicated region
  $region18: #{basic_block_forward.1} parent=0 // pred_check
    _
  $region19: #{basic_block_forward.1} parent=0 // pred_check_branch
    %19 = sbr.rel (0) target = $region21
  $region20: #{basic_block_forward.1} parent=0 // pred_region
    _
  $region21: #{basic_block_forward.1} parent=0 // pred_fallthru
    _
  %v20 = vld [vmem:[%s0] sm:$0xff]
  %v21 = vld [vmem:[%s0 + $0x8] sm:$0xff]
  %v22 = vld [vmem:[%s2] sm:$0x1]
  %v24 = vrot.slane %v20, 1
  %vm27 = vcmask 1040384
  %v28 = vrot.slane %v20, 7
  %v29 = vrot.slane %v21, 7
  %v30 = vsel %vm27, %v28, %v29
  %v33 = vsel %vm27, %v24, %v28
  %vm34 = vcmask 1046528
  %v35 = vrot.slane %v21, 1
  %v36 = vsel %vm34, %v24, %v35
  %v40 = vsel %vm34, %v35, %v29
  %41 = vrot.lane.b32.xlu0 %v33, 7
  %v42 = vpop.permute.xlu0 %41
  %43 = vrot.lane.b32.xlu0 %v30, 7
  %v44 = vpop.permute.xlu0 %43
  %v45 = vld [vmem:[%s1] sm:$0x1]
  %v46 = vlaneseq
  %v47 = vshrl.u32 %v46, 7
  %v48 = vsub.s32 0, %v47
  %v49 = vrot.slane %v45, %v48
  %v50 = vmul.f32 %v42, %v49
  %v51 = vmul.f32 %v44, %v49
  %v53 = vlaneseq
  %v54 = vshrl.u32 %v53, 7
  %v55 = vsub.s32 0, %v54
  %v56 = vrot.slane %v22, %v55
  %v58 = vadd.f32 %v56, %v50
  %v59 = vadd.f32 %v56, %v51
  %60 = vrot.lane.b32.xlu0 %v33, 6
  %v61 = vpop.permute.xlu0 %60
  %62 = vrot.lane.b32.xlu0 %v30, 6
  %v63 = vpop.permute.xlu0 %62
  %v64 = vld [vmem:[%s1 + $0x1] sm:$0x1]
  %v65 = vlaneseq
  %v66 = vshrl.u32 %v65, 7
  %v67 = vsub.s32 0, %v66
  %v68 = vrot.slane %v64, %v67
  %v69 = vmul.f32 %v61, %v68
  %v70 = vmul.f32 %v63, %v68
  %v71 = vadd.f32 %v58, %v69
  %v72 = vadd.f32 %v59, %v70
  %73 = vrot.lane.b32.xlu0 %v33, 5
  %v74 = vpop.permute.xlu0 %73
  %75 = vrot.lane.b32.xlu0 %v30, 5
  %v76 = vpop.permute.xlu0 %75
  %v77 = vld [vmem:[%s1 + $0x2] sm:$0x1]
  %v78 = vlaneseq
  %v79 = vshrl.u32 %v78, 7
  %v80 = vsub.s32 0, %v79
  %v81 = vrot.slane %v77, %v80
  %v82 = vmul.f32 %v74, %v81
  %v83 = vmul.f32 %v76, %v81
  %v84 = vadd.f32 %v71, %v82
  %v85 = vadd.f32 %v72, %v83
  %86 = vrot.lane.b32.xlu0 %v33, 4
  %v87 = vpop.permute.xlu0 %86
  %88 = vrot.lane.b32.xlu0 %v30, 4
  %v89 = vpop.permute.xlu0 %88
  %v90 = vld [vmem:[%s1 + $0x3] sm:$0x1]
  %v91 = vlaneseq
  %v92 = vshrl.u32 %v91, 7
  %v93 = vsub.s32 0, %v92
  %v94 = vrot.slane %v90, %v93
  %v95 = vmul.f32 %v87, %v94
  %v96 = vmul.f32 %v89, %v94
  %v97 = vadd.f32 %v84, %v95
  %v98 = vadd.f32 %v85, %v96
  %99 = vrot.lane.b32.xlu0 %v33, 3
  %v100 = vpop.permute.xlu0 %99
  %101 = vrot.lane.b32.xlu0 %v30, 3
  %v102 = vpop.permute.xlu0 %101
  %v103 = vld [vmem:[%s1 + $0x4] sm:$0x1]
  %v104 = vlaneseq
  %v105 = vshrl.u32 %v104, 7
  %v106 = vsub.s32 0, %v105
  %v107 = vrot.slane %v103, %v106
  %v108 = vmul.f32 %v100, %v107
  %v109 = vmul.f32 %v102, %v107
  %v110 = vadd.f32 %v97, %v108
  %v111 = vadd.f32 %v98, %v109
  %112 = vrot.lane.b32.xlu0 %v33, 2
  %v113 = vpop.permute.xlu0 %112
  %114 = vrot.lane.b32.xlu0 %v30, 2
  %v115 = vpop.permute.xlu0 %114
  %v116 = vld [vmem:[%s1 + $0x5] sm:$0x1]
  %v117 = vlaneseq
  %v118 = vshrl.u32 %v117, 7
  %v119 = vsub.s32 0, %v118
  %v120 = vrot.slane %v116, %v119
  %v121 = vmul.f32 %v113, %v120
  %v122 = vmul.f32 %v115, %v120
  %v123 = vadd.f32 %v110, %v121
  %v124 = vadd.f32 %v111, %v122
  %125 = vrot.lane.b32.xlu0 %v33, 1
  %v126 = vpop.permute.xlu0 %125
  %127 = vrot.lane.b32.xlu0 %v30, 1
  %v128 = vpop.permute.xlu0 %127
  %v129 = vld [vmem:[%s1 + $0x6] sm:$0x1]
  %v130 = vlaneseq
  %v131 = vshrl.u32 %v130, 7
  %v132 = vsub.s32 0, %v131
  %v133 = vrot.slane %v129, %v132
  %v134 = vmul.f32 %v126, %v133
  %v135 = vmul.f32 %v128, %v133
  %v136 = vadd.f32 %v123, %v134
  %v137 = vadd.f32 %v124, %v135
  %v138 = vld [vmem:[%s1 + $0x7] sm:$0x1]
  %v139 = vlaneseq
  %v140 = vshrl.u32 %v139, 7
  %v141 = vsub.s32 0, %v140
  %v142 = vrot.slane %v138, %v141
  %v143 = vmul.f32 %v33, %v142
  %v144 = vmul.f32 %v30, %v142
  %v145 = vadd.f32 %v136, %v143
  %v146 = vadd.f32 %v137, %v144
  %147 = vrot.lane.b32.xlu0 %v33, 127
  %v148 = vpop.permute.xlu0 %147
  %149 = vrot.lane.b32.xlu0 %v30, 127
  %v150 = vpop.permute.xlu0 %149
  %v151 = vld [vmem:[%s1 + $0x8] sm:$0x1]
  %v152 = vlaneseq
  %v153 = vshrl.u32 %v152, 7
  %v154 = vsub.s32 0, %v153
  %v155 = vrot.slane %v151, %v154
  %v156 = vmul.f32 %v148, %v155
  %v157 = vmul.f32 %v150, %v155
  %v158 = vadd.f32 %v145, %v156
  %v159 = vadd.f32 %v146, %v157
  %160 = vrot.lane.b32.xlu0 %v33, 126
  %v161 = vpop.permute.xlu0 %160
  %162 = vrot.lane.b32.xlu0 %v30, 126
  %v163 = vpop.permute.xlu0 %162
  %v164 = vld [vmem:[%s1 + $0x9] sm:$0x1]
  %v165 = vlaneseq
  %v166 = vshrl.u32 %v165, 7
  %v167 = vsub.s32 0, %v166
  %v168 = vrot.slane %v164, %v167
  %v169 = vmul.f32 %v161, %v168
  %v170 = vmul.f32 %v163, %v168
  %v171 = vadd.f32 %v158, %v169
  %v172 = vadd.f32 %v159, %v170
  %173 = vrot.lane.b32.xlu0 %v33, 125
  %v174 = vpop.permute.xlu0 %173
  %175 = vrot.lane.b32.xlu0 %v30, 125
  %v176 = vpop.permute.xlu0 %175
  %v177 = vld [vmem:[%s1 + $0xa] sm:$0x1]
  %v178 = vlaneseq
  %v179 = vshrl.u32 %v178, 7
  %v180 = vsub.s32 0, %v179
  %v181 = vrot.slane %v177, %v180
  %v182 = vmul.f32 %v174, %v181
  %v183 = vmul.f32 %v176, %v181
  %v184 = vadd.f32 %v171, %v182
  %v185 = vadd.f32 %v172, %v183
  %186 = vrot.lane.b32.xlu0 %v33, 124
  %v187 = vpop.permute.xlu0 %186
  %188 = vrot.lane.b32.xlu0 %v30, 124
  %v189 = vpop.permute.xlu0 %188
  %v190 = vld [vmem:[%s1 + $0xb] sm:$0x1]
  %v191 = vlaneseq
  %v192 = vshrl.u32 %v191, 7
  %v193 = vsub.s32 0, %v192
  %v194 = vrot.slane %v190, %v193
  %v195 = vmul.f32 %v187, %v194
  %v196 = vmul.f32 %v189, %v194
  %v197 = vadd.f32 %v184, %v195
  %v198 = vadd.f32 %v185, %v196
  %199 = vrot.lane.b32.xlu0 %v33, 123
  %v200 = vpop.permute.xlu0 %199
  %201 = vrot.lane.b32.xlu0 %v30, 123
  %v202 = vpop.permute.xlu0 %201
  %v203 = vld [vmem:[%s1 + $0xc] sm:$0x1]
  %v204 = vlaneseq
  %v205 = vshrl.u32 %v204, 7
  %v206 = vsub.s32 0, %v205
  %v207 = vrot.slane %v203, %v206
  %v208 = vmul.f32 %v200, %v207
  %v209 = vmul.f32 %v202, %v207
  %v210 = vadd.f32 %v197, %v208
  %v211 = vadd.f32 %v198, %v209
  %212 = vrot.lane.b32.xlu0 %v33, 122
  %v213 = vpop.permute.xlu0 %212
  %214 = vrot.lane.b32.xlu0 %v30, 122
  %v215 = vpop.permute.xlu0 %214
  %v216 = vld [vmem:[%s1 + $0xd] sm:$0x1]
  %v217 = vlaneseq
  %v218 = vshrl.u32 %v217, 7
  %v219 = vsub.s32 0, %v218
  %v220 = vrot.slane %v216, %v219
  %v221 = vmul.f32 %v213, %v220
  %v222 = vmul.f32 %v215, %v220
  %v223 = vadd.f32 %v210, %v221
  %v224 = vadd.f32 %v211, %v222
  %225 = vrot.lane.b32.xlu0 %v33, 121
  %v226 = vpop.permute.xlu0 %225
  %227 = vrot.lane.b32.xlu0 %v30, 121
  %v228 = vpop.permute.xlu0 %227
  %v229 = vld [vmem:[%s1 + $0xe] sm:$0x1]
  %v230 = vlaneseq
  %v231 = vshrl.u32 %v230, 7
  %v232 = vsub.s32 0, %v231
  %v233 = vrot.slane %v229, %v232
  %v234 = vmul.f32 %v226, %v233
  %v235 = vmul.f32 %v228, %v233
  %v236 = vadd.f32 %v223, %v234
  %v237 = vadd.f32 %v224, %v235
  %238 = vrot.lane.b32.xlu0 %v20, 7
  %v239 = vpop.permute.xlu0 %238
  %240 = vrot.lane.b32.xlu0 %v21, 7
  %v241 = vpop.permute.xlu0 %240
  %v242 = vld [vmem:[%s1 + $0xf] sm:$0x1]
  %v243 = vlaneseq
  %v244 = vshrl.u32 %v243, 7
  %v245 = vsub.s32 0, %v244
  %v246 = vrot.slane %v242, %v245
  %v247 = vmul.f32 %v239, %v246
  %v248 = vmul.f32 %v241, %v246
  %v249 = vadd.f32 %v236, %v247
  %v250 = vadd.f32 %v237, %v248
  %251 = vrot.lane.b32.xlu0 %v20, 6
  %v252 = vpop.permute.xlu0 %251
  %253 = vrot.lane.b32.xlu0 %v21, 6
  %v254 = vpop.permute.xlu0 %253
  %v255 = vld [vmem:[%s1 + $0x10] sm:$0x1]
  %v256 = vlaneseq
  %v257 = vshrl.u32 %v256, 7
  %v258 = vsub.s32 0, %v257
  %v259 = vrot.slane %v255, %v258
  %v260 = vmul.f32 %v252, %v259
  %v261 = vmul.f32 %v254, %v259
  %v262 = vadd.f32 %v249, %v260
  %v263 = vadd.f32 %v250, %v261
  %264 = vrot.lane.b32.xlu0 %v20, 5
  %v265 = vpop.permute.xlu0 %264
  %266 = vrot.lane.b32.xlu0 %v21, 5
  %v267 = vpop.permute.xlu0 %266
  %v268 = vld [vmem:[%s1 + $0x11] sm:$0x1]
  %v269 = vlaneseq
  %v270 = vshrl.u32 %v269, 7
  %v271 = vsub.s32 0, %v270
  %v272 = vrot.slane %v268, %v271
  %v273 = vmul.f32 %v265, %v272
  %v274 = vmul.f32 %v267, %v272
  %v275 = vadd.f32 %v262, %v273
  %v276 = vadd.f32 %v263, %v274
  %277 = vrot.lane.b32.xlu0 %v20, 4
  %v278 = vpop.permute.xlu0 %277
  %279 = vrot.lane.b32.xlu0 %v21, 4
  %v280 = vpop.permute.xlu0 %279
  %v281 = vld [vmem:[%s1 + $0x12] sm:$0x1]
  %v282 = vlaneseq
  %v283 = vshrl.u32 %v282, 7
  %v284 = vsub.s32 0, %v283
  %v285 = vrot.slane %v281, %v284
  %v286 = vmul.f32 %v278, %v285
  %v287 = vmul.f32 %v280, %v285
  %v288 = vadd.f32 %v275, %v286
  %v289 = vadd.f32 %v276, %v287
  %290 = vrot.lane.b32.xlu0 %v20, 3
  %v291 = vpop.permute.xlu0 %290
  %292 = vrot.lane.b32.xlu0 %v21, 3
  %v293 = vpop.permute.xlu0 %292
  %v294 = vld [vmem:[%s1 + $0x13] sm:$0x1]
  %v295 = vlaneseq
  %v296 = vshrl.u32 %v295, 7
  %v297 = vsub.s32 0, %v296
  %v298 = vrot.slane %v294, %v297
  %v299 = vmul.f32 %v291, %v298
  %v300 = vmul.f32 %v293, %v298
  %v301 = vadd.f32 %v288, %v299
  %v302 = vadd.f32 %v289, %v300
  %303 = vrot.lane.b32.xlu0 %v20, 2
  %v304 = vpop.permute.xlu0 %303
  %305 = vrot.lane.b32.xlu0 %v21, 2
  %v306 = vpop.permute.xlu0 %305
  %v307 = vld [vmem:[%s1 + $0x14] sm:$0x1]
  %v308 = vlaneseq
  %v309 = vshrl.u32 %v308, 7
  %v310 = vsub.s32 0, %v309
  %v311 = vrot.slane %v307, %v310
  %v312 = vmul.f32 %v304, %v311
  %v313 = vmul.f32 %v306, %v311
  %v314 = vadd.f32 %v301, %v312
  %v315 = vadd.f32 %v302, %v313
  %316 = vrot.lane.b32.xlu0 %v20, 1
  %v317 = vpop.permute.xlu0 %316
  %318 = vrot.lane.b32.xlu0 %v21, 1
  %v319 = vpop.permute.xlu0 %318
  %v320 = vld [vmem:[%s1 + $0x15] sm:$0x1]
  %v321 = vlaneseq
  %v322 = vshrl.u32 %v321, 7
  %v323 = vsub.s32 0, %v322
  %v324 = vrot.slane %v320, %v323
  %v325 = vmul.f32 %v317, %v324
  %v326 = vmul.f32 %v319, %v324
  %v327 = vadd.f32 %v314, %v325
  %v328 = vadd.f32 %v315, %v326
  %v329 = vld [vmem:[%s1 + $0x16] sm:$0x1]
  %v330 = vlaneseq
  %v331 = vshrl.u32 %v330, 7
  %v332 = vsub.s32 0, %v331
  %v333 = vrot.slane %v329, %v332
  %v334 = vmul.f32 %v20, %v333
  %v335 = vmul.f32 %v21, %v333
  %v336 = vadd.f32 %v327, %v334
  %v337 = vadd.f32 %v328, %v335
  %338 = vrot.lane.b32.xlu0 %v20, 127
  %v339 = vpop.permute.xlu0 %338
  %340 = vrot.lane.b32.xlu0 %v21, 127
  %v341 = vpop.permute.xlu0 %340
  %v342 = vld [vmem:[%s1 + $0x17] sm:$0x1]
  %v343 = vlaneseq
  %v344 = vshrl.u32 %v343, 7
  %v345 = vsub.s32 0, %v344
  %v346 = vrot.slane %v342, %v345
  %v347 = vmul.f32 %v339, %v346
  %v348 = vmul.f32 %v341, %v346
  %v349 = vadd.f32 %v336, %v347
  %v350 = vadd.f32 %v337, %v348
  %351 = vrot.lane.b32.xlu0 %v20, 126
  %v352 = vpop.permute.xlu0 %351
  %353 = vrot.lane.b32.xlu0 %v21, 126
  %v354 = vpop.permute.xlu0 %353
  %v355 = vld [vmem:[%s1 + $0x18] sm:$0x1]
  %v356 = vlaneseq
  %v357 = vshrl.u32 %v356, 7
  %v358 = vsub.s32 0, %v357
  %v359 = vrot.slane %v355, %v358
  %v360 = vmul.f32 %v352, %v359
  %v361 = vmul.f32 %v354, %v359
  %v362 = vadd.f32 %v349, %v360
  %v363 = vadd.f32 %v350, %v361
  %364 = vrot.lane.b32.xlu0 %v20, 125
  %v365 = vpop.permute.xlu0 %364
  %366 = vrot.lane.b32.xlu0 %v21, 125
  %v367 = vpop.permute.xlu0 %366
  %v368 = vld [vmem:[%s1 + $0x19] sm:$0x1]
  %v369 = vlaneseq
  %v370 = vshrl.u32 %v369, 7
  %v371 = vsub.s32 0, %v370
  %v372 = vrot.slane %v368, %v371
  %v373 = vmul.f32 %v365, %v372
  %v374 = vmul.f32 %v367, %v372
  %v375 = vadd.f32 %v362, %v373
  %v376 = vadd.f32 %v363, %v374
  %377 = vrot.lane.b32.xlu0 %v20, 124
  %v378 = vpop.permute.xlu0 %377
  %379 = vrot.lane.b32.xlu0 %v21, 124
  %v380 = vpop.permute.xlu0 %379
  %v381 = vld [vmem:[%s1 + $0x1a] sm:$0x1]
  %v382 = vlaneseq
  %v383 = vshrl.u32 %v382, 7
  %v384 = vsub.s32 0, %v383
  %v385 = vrot.slane %v381, %v384
  %v386 = vmul.f32 %v378, %v385
  %v387 = vmul.f32 %v380, %v385
  %v388 = vadd.f32 %v375, %v386
  %v389 = vadd.f32 %v376, %v387
  %390 = vrot.lane.b32.xlu0 %v20, 123
  %v391 = vpop.permute.xlu0 %390
  %392 = vrot.lane.b32.xlu0 %v21, 123
  %v393 = vpop.permute.xlu0 %392
  %v394 = vld [vmem:[%s1 + $0x1b] sm:$0x1]
  %v395 = vlaneseq
  %v396 = vshrl.u32 %v395, 7
  %v397 = vsub.s32 0, %v396
  %v398 = vrot.slane %v394, %v397
  %v399 = vmul.f32 %v391, %v398
  %v400 = vmul.f32 %v393, %v398
  %v401 = vadd.f32 %v388, %v399
  %v402 = vadd.f32 %v389, %v400
  %403 = vrot.lane.b32.xlu0 %v20, 122
  %v404 = vpop.permute.xlu0 %403
  %405 = vrot.lane.b32.xlu0 %v21, 122
  %v406 = vpop.permute.xlu0 %405
  %v407 = vld [vmem:[%s1 + $0x1c] sm:$0x1]
  %v408 = vlaneseq
  %v409 = vshrl.u32 %v408, 7
  %v410 = vsub.s32 0, %v409
  %v411 = vrot.slane %v407, %v410
  %v412 = vmul.f32 %v404, %v411
  %v413 = vmul.f32 %v406, %v411
  %v414 = vadd.f32 %v401, %v412
  %v415 = vadd.f32 %v402, %v413
  %416 = vrot.lane.b32.xlu0 %v20, 121
  %v417 = vpop.permute.xlu0 %416
  %418 = vrot.lane.b32.xlu0 %v21, 121
  %v419 = vpop.permute.xlu0 %418
  %v420 = vld [vmem:[%s1 + $0x1d] sm:$0x1]
  %v421 = vlaneseq
  %v422 = vshrl.u32 %v421, 7
  %v423 = vsub.s32 0, %v422
  %v424 = vrot.slane %v420, %v423
  %v425 = vmul.f32 %v417, %v424
  %v426 = vmul.f32 %v419, %v424
  %v427 = vadd.f32 %v414, %v425
  %v428 = vadd.f32 %v415, %v426
  %429 = vrot.lane.b32.xlu0 %v36, 7
  %v430 = vpop.permute.xlu0 %429
  %431 = vrot.lane.b32.xlu0 %v40, 7
  %v432 = vpop.permute.xlu0 %431
  %v433 = vld [vmem:[%s1 + $0x1e] sm:$0x1]
  %v434 = vlaneseq
  %v435 = vshrl.u32 %v434, 7
  %v436 = vsub.s32 0, %v435
  %v437 = vrot.slane %v433, %v436
  %v438 = vmul.f32 %v430, %v437
  %v439 = vmul.f32 %v432, %v437
  %v440 = vadd.f32 %v427, %v438
  %v441 = vadd.f32 %v428, %v439
  %442 = vrot.lane.b32.xlu0 %v36, 6
  %v443 = vpop.permute.xlu0 %442
  %444 = vrot.lane.b32.xlu0 %v40, 6
  %v445 = vpop.permute.xlu0 %444
  %v446 = vld [vmem:[%s1 + $0x1f] sm:$0x1]
  %v447 = vlaneseq
  %v448 = vshrl.u32 %v447, 7
  %v449 = vsub.s32 0, %v448
  %v450 = vrot.slane %v446, %v449
  %v451 = vmul.f32 %v443, %v450
  %v452 = vmul.f32 %v445, %v450
  %v453 = vadd.f32 %v440, %v451
  %v454 = vadd.f32 %v441, %v452
  %455 = vrot.lane.b32.xlu0 %v36, 5
  %v456 = vpop.permute.xlu0 %455
  %457 = vrot.lane.b32.xlu0 %v40, 5
  %v458 = vpop.permute.xlu0 %457
  %v459 = vld [vmem:[%s1 + $0x20] sm:$0x1]
  %v460 = vlaneseq
  %v461 = vshrl.u32 %v460, 7
  %v462 = vsub.s32 0, %v461
  %v463 = vrot.slane %v459, %v462
  %v464 = vmul.f32 %v456, %v463
  %v465 = vmul.f32 %v458, %v463
  %v466 = vadd.f32 %v453, %v464
  %v467 = vadd.f32 %v454, %v465
  %468 = vrot.lane.b32.xlu0 %v36, 4
  %v469 = vpop.permute.xlu0 %468
  %470 = vrot.lane.b32.xlu0 %v40, 4
  %v471 = vpop.permute.xlu0 %470
  %v472 = vld [vmem:[%s1 + $0x21] sm:$0x1]
  %v473 = vlaneseq
  %v474 = vshrl.u32 %v473, 7
  %v475 = vsub.s32 0, %v474
  %v476 = vrot.slane %v472, %v475
  %v477 = vmul.f32 %v469, %v476
  %v478 = vmul.f32 %v471, %v476
  %v479 = vadd.f32 %v466, %v477
  %v480 = vadd.f32 %v467, %v478
  %481 = vrot.lane.b32.xlu0 %v36, 3
  %v482 = vpop.permute.xlu0 %481
  %483 = vrot.lane.b32.xlu0 %v40, 3
  %v484 = vpop.permute.xlu0 %483
  %v485 = vld [vmem:[%s1 + $0x22] sm:$0x1]
  %v486 = vlaneseq
  %v487 = vshrl.u32 %v486, 7
  %v488 = vsub.s32 0, %v487
  %v489 = vrot.slane %v485, %v488
  %v490 = vmul.f32 %v482, %v489
  %v491 = vmul.f32 %v484, %v489
  %v492 = vadd.f32 %v479, %v490
  %v493 = vadd.f32 %v480, %v491
  %494 = vrot.lane.b32.xlu0 %v36, 2
  %v495 = vpop.permute.xlu0 %494
  %496 = vrot.lane.b32.xlu0 %v40, 2
  %v497 = vpop.permute.xlu0 %496
  %v498 = vld [vmem:[%s1 + $0x23] sm:$0x1]
  %v499 = vlaneseq
  %v500 = vshrl.u32 %v499, 7
  %v501 = vsub.s32 0, %v500
  %v502 = vrot.slane %v498, %v501
  %v503 = vmul.f32 %v495, %v502
  %v504 = vmul.f32 %v497, %v502
  %v505 = vadd.f32 %v492, %v503
  %v506 = vadd.f32 %v493, %v504
  %507 = vrot.lane.b32.xlu0 %v36, 1
  %v508 = vpop.permute.xlu0 %507
  %509 = vrot.lane.b32.xlu0 %v40, 1
  %v510 = vpop.permute.xlu0 %509
  %v511 = vld [vmem:[%s1 + $0x24] sm:$0x1]
  %v512 = vlaneseq
  %v513 = vshrl.u32 %v512, 7
  %v514 = vsub.s32 0, %v513
  %v515 = vrot.slane %v511, %v514
  %v516 = vmul.f32 %v508, %v515
  %v517 = vmul.f32 %v510, %v515
  %v518 = vadd.f32 %v505, %v516
  %v519 = vadd.f32 %v506, %v517
  %v520 = vld [vmem:[%s1 + $0x25] sm:$0x1]
  %v521 = vlaneseq
  %v522 = vshrl.u32 %v521, 7
  %v523 = vsub.s32 0, %v522
  %v524 = vrot.slane %v520, %v523
  %v525 = vmul.f32 %v36, %v524
  %v526 = vmul.f32 %v40, %v524
  %v527 = vadd.f32 %v518, %v525
  %v528 = vadd.f32 %v519, %v526
  %529 = vrot.lane.b32.xlu0 %v36, 127
  %v530 = vpop.permute.xlu0 %529
  %531 = vrot.lane.b32.xlu0 %v40, 127
  %v532 = vpop.permute.xlu0 %531
  %v533 = vld [vmem:[%s1 + $0x26] sm:$0x1]
  %v534 = vlaneseq
  %v535 = vshrl.u32 %v534, 7
  %v536 = vsub.s32 0, %v535
  %v537 = vrot.slane %v533, %v536
  %v538 = vmul.f32 %v530, %v537
  %v539 = vmul.f32 %v532, %v537
  %v540 = vadd.f32 %v527, %v538
  %v541 = vadd.f32 %v528, %v539
  %542 = vrot.lane.b32.xlu0 %v36, 126
  %v543 = vpop.permute.xlu0 %542
  %544 = vrot.lane.b32.xlu0 %v40, 126
  %v545 = vpop.permute.xlu0 %544
  %v546 = vld [vmem:[%s1 + $0x27] sm:$0x1]
  %v547 = vlaneseq
  %v548 = vshrl.u32 %v547, 7
  %v549 = vsub.s32 0, %v548
  %v550 = vrot.slane %v546, %v549
  %v551 = vmul.f32 %v543, %v550
  %v552 = vmul.f32 %v545, %v550
  %v553 = vadd.f32 %v540, %v551
  %v554 = vadd.f32 %v541, %v552
  %555 = vrot.lane.b32.xlu0 %v36, 125
  %v556 = vpop.permute.xlu0 %555
  %557 = vrot.lane.b32.xlu0 %v40, 125
  %v558 = vpop.permute.xlu0 %557
  %v559 = vld [vmem:[%s1 + $0x28] sm:$0x1]
  %v560 = vlaneseq
  %v561 = vshrl.u32 %v560, 7
  %v562 = vsub.s32 0, %v561
  %v563 = vrot.slane %v559, %v562
  %v564 = vmul.f32 %v556, %v563
  %v565 = vmul.f32 %v558, %v563
  %v566 = vadd.f32 %v553, %v564
  %v567 = vadd.f32 %v554, %v565
  %568 = vrot.lane.b32.xlu0 %v36, 124
  %v569 = vpop.permute.xlu0 %568
  %570 = vrot.lane.b32.xlu0 %v40, 124
  %v571 = vpop.permute.xlu0 %570
  %v572 = vld [vmem:[%s1 + $0x29] sm:$0x1]
  %v573 = vlaneseq
  %v574 = vshrl.u32 %v573, 7
  %v575 = vsub.s32 0, %v574
  %v576 = vrot.slane %v572, %v575
  %v577 = vmul.f32 %v569, %v576
  %v578 = vmul.f32 %v571, %v576
  %v579 = vadd.f32 %v566, %v577
  %v580 = vadd.f32 %v567, %v578
  %581 = vrot.lane.b32.xlu0 %v36, 123
  %v582 = vpop.permute.xlu0 %581
  %583 = vrot.lane.b32.xlu0 %v40, 123
  %v584 = vpop.permute.xlu0 %583
  %v585 = vld [vmem:[%s1 + $0x2a] sm:$0x1]
  %v586 = vlaneseq
  %v587 = vshrl.u32 %v586, 7
  %v588 = vsub.s32 0, %v587
  %v589 = vrot.slane %v585, %v588
  %v590 = vmul.f32 %v582, %v589
  %v591 = vmul.f32 %v584, %v589
  %v592 = vadd.f32 %v579, %v590
  %v593 = vadd.f32 %v580, %v591
  %594 = vrot.lane.b32.xlu0 %v36, 122
  %v595 = vpop.permute.xlu0 %594
  %596 = vrot.lane.b32.xlu0 %v40, 122
  %v597 = vpop.permute.xlu0 %596
  %v598 = vld [vmem:[%s1 + $0x2b] sm:$0x1]
  %v599 = vlaneseq
  %v600 = vshrl.u32 %v599, 7
  %v601 = vsub.s32 0, %v600
  %v602 = vrot.slane %v598, %v601
  %v603 = vmul.f32 %v595, %v602
  %v604 = vmul.f32 %v597, %v602
  %v605 = vadd.f32 %v592, %v603
  %v606 = vadd.f32 %v593, %v604
  %607 = vrot.lane.b32.xlu0 %v36, 121
  %v608 = vpop.permute.xlu0 %607
  %609 = vrot.lane.b32.xlu0 %v40, 121
  %v610 = vpop.permute.xlu0 %609
  %v611 = vld [vmem:[%s1 + $0x2c] sm:$0x1]
  %v612 = vlaneseq
  %v613 = vshrl.u32 %v612, 7
  %v614 = vsub.s32 0, %v613
  %v615 = vrot.slane %v611, %v614
  %v616 = vmul.f32 %v608, %v615
  %v617 = vmul.f32 %v610, %v615
  %v618 = vadd.f32 %v605, %v616
  %v619 = vadd.f32 %v606, %v617
  %v620 = vmax.f32 %v618, 0.0
  %v621 = vmax.f32 %v619, 0.0
  %v622 = vld [vmem:[%s4] sm:$0x1]
  %v624 = vlaneseq
  %v625 = vshrl.u32 %v624, 7
  %v626 = vsub.s32 0, %v625
  %v627 = vrot.slane %v622, %v626
  %v629 = vadd.f32 %v20, %v627
  %v630 = vadd.f32 %v21, %v627
  %v632 = vrot.slane %v620, 1
  %v635 = vrot.slane %v620, 7
  %v636 = vrot.slane %v621, 7
  %v637 = vsel %vm27, %v635, %v636
  %v640 = vsel %vm27, %v632, %v635
  %v641 = vrot.slane %v621, 1
  %v642 = vsel %vm34, %v632, %v641
  %v646 = vsel %vm34, %v641, %v636
  %647 = vrot.lane.b32.xlu0 %v640, 7
  %v648 = vpop.permute.xlu0 %647
  %649 = vrot.lane.b32.xlu0 %v637, 7
  %v650 = vpop.permute.xlu0 %649
  %v651 = vld [vmem:[%s3] sm:$0x1]
  %v652 = vlaneseq
  %v653 = vshrl.u32 %v652, 7
  %v654 = vsub.s32 0, %v653
  %v655 = vrot.slane %v651, %v654
  %v656 = vmul.f32 %v648, %v655
  %v657 = vmul.f32 %v650, %v655
  %v658 = vadd.f32 %v629, %v656
  %v659 = vadd.f32 %v630, %v657
  %660 = vrot.lane.b32.xlu0 %v640, 6
  %v661 = vpop.permute.xlu0 %660
  %662 = vrot.lane.b32.xlu0 %v637, 6
  %v663 = vpop.permute.xlu0 %662
  %v664 = vld [vmem:[%s3 + $0x1] sm:$0x1]
  %v665 = vlaneseq
  %v666 = vshrl.u32 %v665, 7
  %v667 = vsub.s32 0, %v666
  %v668 = vrot.slane %v664, %v667
  %v669 = vmul.f32 %v661, %v668
  %v670 = vmul.f32 %v663, %v668
  %v671 = vadd.f32 %v658, %v669
  %v672 = vadd.f32 %v659, %v670
  %673 = vrot.lane.b32.xlu0 %v640, 5
  %v674 = vpop.permute.xlu0 %673
  %675 = vrot.lane.b32.xlu0 %v637, 5
  %v676 = vpop.permute.xlu0 %675
  %v677 = vld [vmem:[%s3 + $0x2] sm:$0x1]
  %v678 = vlaneseq
  %v679 = vshrl.u32 %v678, 7
  %v680 = vsub.s32 0, %v679
  %v681 = vrot.slane %v677, %v680
  %v682 = vmul.f32 %v674, %v681
  %v683 = vmul.f32 %v676, %v681
  %v684 = vadd.f32 %v671, %v682
  %v685 = vadd.f32 %v672, %v683
  %686 = vrot.lane.b32.xlu0 %v640, 4
  %v687 = vpop.permute.xlu0 %686
  %688 = vrot.lane.b32.xlu0 %v637, 4
  %v689 = vpop.permute.xlu0 %688
  %v690 = vld [vmem:[%s3 + $0x3] sm:$0x1]
  %v691 = vlaneseq
  %v692 = vshrl.u32 %v691, 7
  %v693 = vsub.s32 0, %v692
  %v694 = vrot.slane %v690, %v693
  %v695 = vmul.f32 %v687, %v694
  %v696 = vmul.f32 %v689, %v694
  %v697 = vadd.f32 %v684, %v695
  %v698 = vadd.f32 %v685, %v696
  %699 = vrot.lane.b32.xlu0 %v640, 3
  %v700 = vpop.permute.xlu0 %699
  %701 = vrot.lane.b32.xlu0 %v637, 3
  %v702 = vpop.permute.xlu0 %701
  %v703 = vld [vmem:[%s3 + $0x4] sm:$0x1]
  %v704 = vlaneseq
  %v705 = vshrl.u32 %v704, 7
  %v706 = vsub.s32 0, %v705
  %v707 = vrot.slane %v703, %v706
  %v708 = vmul.f32 %v700, %v707
  %v709 = vmul.f32 %v702, %v707
  %v710 = vadd.f32 %v697, %v708
  %v711 = vadd.f32 %v698, %v709
  %712 = vrot.lane.b32.xlu0 %v640, 2
  %v713 = vpop.permute.xlu0 %712
  %714 = vrot.lane.b32.xlu0 %v637, 2
  %v715 = vpop.permute.xlu0 %714
  %v716 = vld [vmem:[%s3 + $0x5] sm:$0x1]
  %v717 = vlaneseq
  %v718 = vshrl.u32 %v717, 7
  %v719 = vsub.s32 0, %v718
  %v720 = vrot.slane %v716, %v719
  %v721 = vmul.f32 %v713, %v720
  %v722 = vmul.f32 %v715, %v720
  %v723 = vadd.f32 %v710, %v721
  %v724 = vadd.f32 %v711, %v722
  %725 = vrot.lane.b32.xlu0 %v640, 1
  %v726 = vpop.permute.xlu0 %725
  %727 = vrot.lane.b32.xlu0 %v637, 1
  %v728 = vpop.permute.xlu0 %727
  %v729 = vld [vmem:[%s3 + $0x6] sm:$0x1]
  %v730 = vlaneseq
  %v731 = vshrl.u32 %v730, 7
  %v732 = vsub.s32 0, %v731
  %v733 = vrot.slane %v729, %v732
  %v734 = vmul.f32 %v726, %v733
  %v735 = vmul.f32 %v728, %v733
  %v736 = vadd.f32 %v723, %v734
  %v737 = vadd.f32 %v724, %v735
  %v738 = vld [vmem:[%s3 + $0x7] sm:$0x1]
  %v739 = vlaneseq
  %v740 = vshrl.u32 %v739, 7
  %v741 = vsub.s32 0, %v740
  %v742 = vrot.slane %v738, %v741
  %v743 = vmul.f32 %v640, %v742
  %v744 = vmul.f32 %v637, %v742
  %v745 = vadd.f32 %v736, %v743
  %v746 = vadd.f32 %v737, %v744
  %747 = vrot.lane.b32.xlu0 %v640, 127
  %v748 = vpop.permute.xlu0 %747
  %749 = vrot.lane.b32.xlu0 %v637, 127
  %v750 = vpop.permute.xlu0 %749
  %v751 = vld [vmem:[%s3 + $0x8] sm:$0x1]
  %v752 = vlaneseq
  %v753 = vshrl.u32 %v752, 7
  %v754 = vsub.s32 0, %v753
  %v755 = vrot.slane %v751, %v754
  %v756 = vmul.f32 %v748, %v755
  %v757 = vmul.f32 %v750, %v755
  %v758 = vadd.f32 %v745, %v756
  %v759 = vadd.f32 %v746, %v757
  %760 = vrot.lane.b32.xlu0 %v640, 126
  %v761 = vpop.permute.xlu0 %760
  %762 = vrot.lane.b32.xlu0 %v637, 126
  %v763 = vpop.permute.xlu0 %762
  %v764 = vld [vmem:[%s3 + $0x9] sm:$0x1]
  %v765 = vlaneseq
  %v766 = vshrl.u32 %v765, 7
  %v767 = vsub.s32 0, %v766
  %v768 = vrot.slane %v764, %v767
  %v769 = vmul.f32 %v761, %v768
  %v770 = vmul.f32 %v763, %v768
  %v771 = vadd.f32 %v758, %v769
  %v772 = vadd.f32 %v759, %v770
  %773 = vrot.lane.b32.xlu0 %v640, 125
  %v774 = vpop.permute.xlu0 %773
  %775 = vrot.lane.b32.xlu0 %v637, 125
  %v776 = vpop.permute.xlu0 %775
  %v777 = vld [vmem:[%s3 + $0xa] sm:$0x1]
  %v778 = vlaneseq
  %v779 = vshrl.u32 %v778, 7
  %v780 = vsub.s32 0, %v779
  %v781 = vrot.slane %v777, %v780
  %v782 = vmul.f32 %v774, %v781
  %v783 = vmul.f32 %v776, %v781
  %v784 = vadd.f32 %v771, %v782
  %v785 = vadd.f32 %v772, %v783
  %786 = vrot.lane.b32.xlu0 %v640, 124
  %v787 = vpop.permute.xlu0 %786
  %788 = vrot.lane.b32.xlu0 %v637, 124
  %v789 = vpop.permute.xlu0 %788
  %v790 = vld [vmem:[%s3 + $0xb] sm:$0x1]
  %v791 = vlaneseq
  %v792 = vshrl.u32 %v791, 7
  %v793 = vsub.s32 0, %v792
  %v794 = vrot.slane %v790, %v793
  %v795 = vmul.f32 %v787, %v794
  %v796 = vmul.f32 %v789, %v794
  %v797 = vadd.f32 %v784, %v795
  %v798 = vadd.f32 %v785, %v796
  %799 = vrot.lane.b32.xlu0 %v640, 123
  %v800 = vpop.permute.xlu0 %799
  %801 = vrot.lane.b32.xlu0 %v637, 123
  %v802 = vpop.permute.xlu0 %801
  %v803 = vld [vmem:[%s3 + $0xc] sm:$0x1]
  %v804 = vlaneseq
  %v805 = vshrl.u32 %v804, 7
  %v806 = vsub.s32 0, %v805
  %v807 = vrot.slane %v803, %v806
  %v808 = vmul.f32 %v800, %v807
  %v809 = vmul.f32 %v802, %v807
  %v810 = vadd.f32 %v797, %v808
  %v811 = vadd.f32 %v798, %v809
  %812 = vrot.lane.b32.xlu0 %v640, 122
  %v813 = vpop.permute.xlu0 %812
  %814 = vrot.lane.b32.xlu0 %v637, 122
  %v815 = vpop.permute.xlu0 %814
  %v816 = vld [vmem:[%s3 + $0xd] sm:$0x1]
  %v817 = vlaneseq
  %v818 = vshrl.u32 %v817, 7
  %v819 = vsub.s32 0, %v818
  %v820 = vrot.slane %v816, %v819
  %v821 = vmul.f32 %v813, %v820
  %v822 = vmul.f32 %v815, %v820
  %v823 = vadd.f32 %v810, %v821
  %v824 = vadd.f32 %v811, %v822
  %825 = vrot.lane.b32.xlu0 %v640, 121
  %v826 = vpop.permute.xlu0 %825
  %827 = vrot.lane.b32.xlu0 %v637, 121
  %v828 = vpop.permute.xlu0 %827
  %v829 = vld [vmem:[%s3 + $0xe] sm:$0x1]
  %v830 = vlaneseq
  %v831 = vshrl.u32 %v830, 7
  %v832 = vsub.s32 0, %v831
  %v833 = vrot.slane %v829, %v832
  %v834 = vmul.f32 %v826, %v833
  %v835 = vmul.f32 %v828, %v833
  %v836 = vadd.f32 %v823, %v834
  %v837 = vadd.f32 %v824, %v835
  %838 = vrot.lane.b32.xlu0 %v620, 7
  %v839 = vpop.permute.xlu0 %838
  %840 = vrot.lane.b32.xlu0 %v621, 7
  %v841 = vpop.permute.xlu0 %840
  %v842 = vld [vmem:[%s3 + $0xf] sm:$0x1]
  %v843 = vlaneseq
  %v844 = vshrl.u32 %v843, 7
  %v845 = vsub.s32 0, %v844
  %v846 = vrot.slane %v842, %v845
  %v847 = vmul.f32 %v839, %v846
  %v848 = vmul.f32 %v841, %v846
  %v849 = vadd.f32 %v836, %v847
  %v850 = vadd.f32 %v837, %v848
  %851 = vrot.lane.b32.xlu0 %v620, 6
  %v852 = vpop.permute.xlu0 %851
  %853 = vrot.lane.b32.xlu0 %v621, 6
  %v854 = vpop.permute.xlu0 %853
  %v855 = vld [vmem:[%s3 + $0x10] sm:$0x1]
  %v856 = vlaneseq
  %v857 = vshrl.u32 %v856, 7
  %v858 = vsub.s32 0, %v857
  %v859 = vrot.slane %v855, %v858
  %v860 = vmul.f32 %v852, %v859
  %v861 = vmul.f32 %v854, %v859
  %v862 = vadd.f32 %v849, %v860
  %v863 = vadd.f32 %v850, %v861
  %864 = vrot.lane.b32.xlu0 %v620, 5
  %v865 = vpop.permute.xlu0 %864
  %866 = vrot.lane.b32.xlu0 %v621, 5
  %v867 = vpop.permute.xlu0 %866
  %v868 = vld [vmem:[%s3 + $0x11] sm:$0x1]
  %v869 = vlaneseq
  %v870 = vshrl.u32 %v869, 7
  %v871 = vsub.s32 0, %v870
  %v872 = vrot.slane %v868, %v871
  %v873 = vmul.f32 %v865, %v872
  %v874 = vmul.f32 %v867, %v872
  %v875 = vadd.f32 %v862, %v873
  %v876 = vadd.f32 %v863, %v874
  %877 = vrot.lane.b32.xlu0 %v620, 4
  %v878 = vpop.permute.xlu0 %877
  %879 = vrot.lane.b32.xlu0 %v621, 4
  %v880 = vpop.permute.xlu0 %879
  %v881 = vld [vmem:[%s3 + $0x12] sm:$0x1]
  %v882 = vlaneseq
  %v883 = vshrl.u32 %v882, 7
  %v884 = vsub.s32 0, %v883
  %v885 = vrot.slane %v881, %v884
  %v886 = vmul.f32 %v878, %v885
  %v887 = vmul.f32 %v880, %v885
  %v888 = vadd.f32 %v875, %v886
  %v889 = vadd.f32 %v876, %v887
  %890 = vrot.lane.b32.xlu0 %v620, 3
  %v891 = vpop.permute.xlu0 %890
  %892 = vrot.lane.b32.xlu0 %v621, 3
  %v893 = vpop.permute.xlu0 %892
  %v894 = vld [vmem:[%s3 + $0x13] sm:$0x1]
  %v895 = vlaneseq
  %v896 = vshrl.u32 %v895, 7
  %v897 = vsub.s32 0, %v896
  %v898 = vrot.slane %v894, %v897
  %v899 = vmul.f32 %v891, %v898
  %v900 = vmul.f32 %v893, %v898
  %v901 = vadd.f32 %v888, %v899
  %v902 = vadd.f32 %v889, %v900
  %903 = vrot.lane.b32.xlu0 %v620, 2
  %v904 = vpop.permute.xlu0 %903
  %905 = vrot.lane.b32.xlu0 %v621, 2
  %v906 = vpop.permute.xlu0 %905
  %v907 = vld [vmem:[%s3 + $0x14] sm:$0x1]
  %v908 = vlaneseq
  %v909 = vshrl.u32 %v908, 7
  %v910 = vsub.s32 0, %v909
  %v911 = vrot.slane %v907, %v910
  %v912 = vmul.f32 %v904, %v911
  %v913 = vmul.f32 %v906, %v911
  %v914 = vadd.f32 %v901, %v912
  %v915 = vadd.f32 %v902, %v913
  %916 = vrot.lane.b32.xlu0 %v620, 1
  %v917 = vpop.permute.xlu0 %916
  %918 = vrot.lane.b32.xlu0 %v621, 1
  %v919 = vpop.permute.xlu0 %918
  %v920 = vld [vmem:[%s3 + $0x15] sm:$0x1]
  %v921 = vlaneseq
  %v922 = vshrl.u32 %v921, 7
  %v923 = vsub.s32 0, %v922
  %v924 = vrot.slane %v920, %v923
  %v925 = vmul.f32 %v917, %v924
  %v926 = vmul.f32 %v919, %v924
  %v927 = vadd.f32 %v914, %v925
  %v928 = vadd.f32 %v915, %v926
  %v929 = vld [vmem:[%s3 + $0x16] sm:$0x1]
  %v930 = vlaneseq
  %v931 = vshrl.u32 %v930, 7
  %v932 = vsub.s32 0, %v931
  %v933 = vrot.slane %v929, %v932
  %v934 = vmul.f32 %v620, %v933
  %v935 = vmul.f32 %v621, %v933
  %v936 = vadd.f32 %v927, %v934
  %v937 = vadd.f32 %v928, %v935
  %938 = vrot.lane.b32.xlu0 %v620, 127
  %v939 = vpop.permute.xlu0 %938
  %940 = vrot.lane.b32.xlu0 %v621, 127
  %v941 = vpop.permute.xlu0 %940
  %v942 = vld [vmem:[%s3 + $0x17] sm:$0x1]
  %v943 = vlaneseq
  %v944 = vshrl.u32 %v943, 7
  %v945 = vsub.s32 0, %v944
  %v946 = vrot.slane %v942, %v945
  %v947 = vmul.f32 %v939, %v946
  %v948 = vmul.f32 %v941, %v946
  %v949 = vadd.f32 %v936, %v947
  %v950 = vadd.f32 %v937, %v948
  %951 = vrot.lane.b32.xlu0 %v620, 126
  %v952 = vpop.permute.xlu0 %951
  %953 = vrot.lane.b32.xlu0 %v621, 126
  %v954 = vpop.permute.xlu0 %953
  %v955 = vld [vmem:[%s3 + $0x18] sm:$0x1]
  %v956 = vlaneseq
  %v957 = vshrl.u32 %v956, 7
  %v958 = vsub.s32 0, %v957
  %v959 = vrot.slane %v955, %v958
  %v960 = vmul.f32 %v952, %v959
  %v961 = vmul.f32 %v954, %v959
  %v962 = vadd.f32 %v949, %v960
  %v963 = vadd.f32 %v950, %v961
  %964 = vrot.lane.b32.xlu0 %v620, 125
  %v965 = vpop.permute.xlu0 %964
  %966 = vrot.lane.b32.xlu0 %v621, 125
  %v967 = vpop.permute.xlu0 %966
  %v968 = vld [vmem:[%s3 + $0x19] sm:$0x1]
  %v969 = vlaneseq
  %v970 = vshrl.u32 %v969, 7
  %v971 = vsub.s32 0, %v970
  %v972 = vrot.slane %v968, %v971
  %v973 = vmul.f32 %v965, %v972
  %v974 = vmul.f32 %v967, %v972
  %v975 = vadd.f32 %v962, %v973
  %v976 = vadd.f32 %v963, %v974
  %977 = vrot.lane.b32.xlu0 %v620, 124
  %v978 = vpop.permute.xlu0 %977
  %979 = vrot.lane.b32.xlu0 %v621, 124
  %v980 = vpop.permute.xlu0 %979
  %v981 = vld [vmem:[%s3 + $0x1a] sm:$0x1]
  %v982 = vlaneseq
  %v983 = vshrl.u32 %v982, 7
  %v984 = vsub.s32 0, %v983
  %v985 = vrot.slane %v981, %v984
  %v986 = vmul.f32 %v978, %v985
  %v987 = vmul.f32 %v980, %v985
  %v988 = vadd.f32 %v975, %v986
  %v989 = vadd.f32 %v976, %v987
  %990 = vrot.lane.b32.xlu0 %v620, 123
  %v991 = vpop.permute.xlu0 %990
  %992 = vrot.lane.b32.xlu0 %v621, 123
  %v993 = vpop.permute.xlu0 %992
  %v994 = vld [vmem:[%s3 + $0x1b] sm:$0x1]
  %v995 = vlaneseq
  %v996 = vshrl.u32 %v995, 7
  %v997 = vsub.s32 0, %v996
  %v998 = vrot.slane %v994, %v997
  %v999 = vmul.f32 %v991, %v998
  %v1000 = vmul.f32 %v993, %v998
  %v1001 = vadd.f32 %v988, %v999
  %v1002 = vadd.f32 %v989, %v1000
  %1003 = vrot.lane.b32.xlu0 %v620, 122
  %v1004 = vpop.permute.xlu0 %1003
  %1005 = vrot.lane.b32.xlu0 %v621, 122
  %v1006 = vpop.permute.xlu0 %1005
  %v1007 = vld [vmem:[%s3 + $0x1c] sm:$0x1]
  %v1008 = vlaneseq
  %v1009 = vshrl.u32 %v1008, 7
  %v1010 = vsub.s32 0, %v1009
  %v1011 = vrot.slane %v1007, %v1010
  %v1012 = vmul.f32 %v1004, %v1011
  %v1013 = vmul.f32 %v1006, %v1011
  %v1014 = vadd.f32 %v1001, %v1012
  %v1015 = vadd.f32 %v1002, %v1013
  %1016 = vrot.lane.b32.xlu0 %v620, 121
  %v1017 = vpop.permute.xlu0 %1016
  %1018 = vrot.lane.b32.xlu0 %v621, 121
  %v1019 = vpop.permute.xlu0 %1018
  %v1020 = vld [vmem:[%s3 + $0x1d] sm:$0x1]
  %v1021 = vlaneseq
  %v1022 = vshrl.u32 %v1021, 7
  %v1023 = vsub.s32 0, %v1022
  %v1024 = vrot.slane %v1020, %v1023
  %v1025 = vmul.f32 %v1017, %v1024
  %v1026 = vmul.f32 %v1019, %v1024
  %v1027 = vadd.f32 %v1014, %v1025
  %v1028 = vadd.f32 %v1015, %v1026
  %1029 = vrot.lane.b32.xlu0 %v642, 7
  %v1030 = vpop.permute.xlu0 %1029
  %1031 = vrot.lane.b32.xlu0 %v646, 7
  %v1032 = vpop.permute.xlu0 %1031
  %v1033 = vld [vmem:[%s3 + $0x1e] sm:$0x1]
  %v1034 = vlaneseq
  %v1035 = vshrl.u32 %v1034, 7
  %v1036 = vsub.s32 0, %v1035
  %v1037 = vrot.slane %v1033, %v1036
  %v1038 = vmul.f32 %v1030, %v1037
  %v1039 = vmul.f32 %v1032, %v1037
  %v1040 = vadd.f32 %v1027, %v1038
  %v1041 = vadd.f32 %v1028, %v1039
  %1042 = vrot.lane.b32.xlu0 %v642, 6
  %v1043 = vpop.permute.xlu0 %1042
  %1044 = vrot.lane.b32.xlu0 %v646, 6
  %v1045 = vpop.permute.xlu0 %1044
  %v1046 = vld [vmem:[%s3 + $0x1f] sm:$0x1]
  %v1047 = vlaneseq
  %v1048 = vshrl.u32 %v1047, 7
  %v1049 = vsub.s32 0, %v1048
  %v1050 = vrot.slane %v1046, %v1049
  %v1051 = vmul.f32 %v1043, %v1050
  %v1052 = vmul.f32 %v1045, %v1050
  %v1053 = vadd.f32 %v1040, %v1051
  %v1054 = vadd.f32 %v1041, %v1052
  %1055 = vrot.lane.b32.xlu0 %v642, 5
  %v1056 = vpop.permute.xlu0 %1055
  %1057 = vrot.lane.b32.xlu0 %v646, 5
  %v1058 = vpop.permute.xlu0 %1057
  %v1059 = vld [vmem:[%s3 + $0x20] sm:$0x1]
  %v1060 = vlaneseq
  %v1061 = vshrl.u32 %v1060, 7
  %v1062 = vsub.s32 0, %v1061
  %v1063 = vrot.slane %v1059, %v1062
  %v1064 = vmul.f32 %v1056, %v1063
  %v1065 = vmul.f32 %v1058, %v1063
  %v1066 = vadd.f32 %v1053, %v1064
  %v1067 = vadd.f32 %v1054, %v1065
  %1068 = vrot.lane.b32.xlu0 %v642, 4
  %v1069 = vpop.permute.xlu0 %1068
  %1070 = vrot.lane.b32.xlu0 %v646, 4
  %v1071 = vpop.permute.xlu0 %1070
  %v1072 = vld [vmem:[%s3 + $0x21] sm:$0x1]
  %v1073 = vlaneseq
  %v1074 = vshrl.u32 %v1073, 7
  %v1075 = vsub.s32 0, %v1074
  %v1076 = vrot.slane %v1072, %v1075
  %v1077 = vmul.f32 %v1069, %v1076
  %v1078 = vmul.f32 %v1071, %v1076
  %v1079 = vadd.f32 %v1066, %v1077
  %v1080 = vadd.f32 %v1067, %v1078
  %1081 = vrot.lane.b32.xlu0 %v642, 3
  %v1082 = vpop.permute.xlu0 %1081
  %1083 = vrot.lane.b32.xlu0 %v646, 3
  %v1084 = vpop.permute.xlu0 %1083
  %v1085 = vld [vmem:[%s3 + $0x22] sm:$0x1]
  %v1086 = vlaneseq
  %v1087 = vshrl.u32 %v1086, 7
  %v1088 = vsub.s32 0, %v1087
  %v1089 = vrot.slane %v1085, %v1088
  %v1090 = vmul.f32 %v1082, %v1089
  %v1091 = vmul.f32 %v1084, %v1089
  %v1092 = vadd.f32 %v1079, %v1090
  %v1093 = vadd.f32 %v1080, %v1091
  %1094 = vrot.lane.b32.xlu0 %v642, 2
  %v1095 = vpop.permute.xlu0 %1094
  %1096 = vrot.lane.b32.xlu0 %v646, 2
  %v1097 = vpop.permute.xlu0 %1096
  %v1098 = vld [vmem:[%s3 + $0x23] sm:$0x1]
  %v1099 = vlaneseq
  %v1100 = vshrl.u32 %v1099, 7
  %v1101 = vsub.s32 0, %v1100
  %v1102 = vrot.slane %v1098, %v1101
  %v1103 = vmul.f32 %v1095, %v1102
  %v1104 = vmul.f32 %v1097, %v1102
  %v1105 = vadd.f32 %v1092, %v1103
  %v1106 = vadd.f32 %v1093, %v1104
  %1107 = vrot.lane.b32.xlu0 %v642, 1
  %v1108 = vpop.permute.xlu0 %1107
  %1109 = vrot.lane.b32.xlu0 %v646, 1
  %v1110 = vpop.permute.xlu0 %1109
  %v1111 = vld [vmem:[%s3 + $0x24] sm:$0x1]
  %v1112 = vlaneseq
  %v1113 = vshrl.u32 %v1112, 7
  %v1114 = vsub.s32 0, %v1113
  %v1115 = vrot.slane %v1111, %v1114
  %v1116 = vmul.f32 %v1108, %v1115
  %v1117 = vmul.f32 %v1110, %v1115
  %v1118 = vadd.f32 %v1105, %v1116
  %v1119 = vadd.f32 %v1106, %v1117
  %v1120 = vld [vmem:[%s3 + $0x25] sm:$0x1]
  %v1121 = vlaneseq
  %v1122 = vshrl.u32 %v1121, 7
  %v1123 = vsub.s32 0, %v1122
  %v1124 = vrot.slane %v1120, %v1123
  %v1125 = vmul.f32 %v642, %v1124
  %v1126 = vmul.f32 %v646, %v1124
  %v1127 = vadd.f32 %v1118, %v1125
  %v1128 = vadd.f32 %v1119, %v1126
  %1129 = vrot.lane.b32.xlu0 %v642, 127
  %v1130 = vpop.permute.xlu0 %1129
  %1131 = vrot.lane.b32.xlu0 %v646, 127
  %v1132 = vpop.permute.xlu0 %1131
  %v1133 = vld [vmem:[%s3 + $0x26] sm:$0x1]
  %v1134 = vlaneseq
  %v1135 = vshrl.u32 %v1134, 7
  %v1136 = vsub.s32 0, %v1135
  %v1137 = vrot.slane %v1133, %v1136
  %v1138 = vmul.f32 %v1130, %v1137
  %v1139 = vmul.f32 %v1132, %v1137
  %v1140 = vadd.f32 %v1127, %v1138
  %v1141 = vadd.f32 %v1128, %v1139
  %1142 = vrot.lane.b32.xlu0 %v642, 126
  %v1143 = vpop.permute.xlu0 %1142
  %1144 = vrot.lane.b32.xlu0 %v646, 126
  %v1145 = vpop.permute.xlu0 %1144
  %v1146 = vld [vmem:[%s3 + $0x27] sm:$0x1]
  %v1147 = vlaneseq
  %v1148 = vshrl.u32 %v1147, 7
  %v1149 = vsub.s32 0, %v1148
  %v1150 = vrot.slane %v1146, %v1149
  %v1151 = vmul.f32 %v1143, %v1150
  %v1152 = vmul.f32 %v1145, %v1150
  %v1153 = vadd.f32 %v1140, %v1151
  %v1154 = vadd.f32 %v1141, %v1152
  %1155 = vrot.lane.b32.xlu0 %v642, 125
  %v1156 = vpop.permute.xlu0 %1155
  %1157 = vrot.lane.b32.xlu0 %v646, 125
  %v1158 = vpop.permute.xlu0 %1157
  %v1159 = vld [vmem:[%s3 + $0x28] sm:$0x1]
  %v1160 = vlaneseq
  %v1161 = vshrl.u32 %v1160, 7
  %v1162 = vsub.s32 0, %v1161
  %v1163 = vrot.slane %v1159, %v1162
  %v1164 = vmul.f32 %v1156, %v1163
  %v1165 = vmul.f32 %v1158, %v1163
  %v1166 = vadd.f32 %v1153, %v1164
  %v1167 = vadd.f32 %v1154, %v1165
  %1168 = vrot.lane.b32.xlu0 %v642, 124
  %v1169 = vpop.permute.xlu0 %1168
  %1170 = vrot.lane.b32.xlu0 %v646, 124
  %v1171 = vpop.permute.xlu0 %1170
  %v1172 = vld [vmem:[%s3 + $0x29] sm:$0x1]
  %v1173 = vlaneseq
  %v1174 = vshrl.u32 %v1173, 7
  %v1175 = vsub.s32 0, %v1174
  %v1176 = vrot.slane %v1172, %v1175
  %v1177 = vmul.f32 %v1169, %v1176
  %v1178 = vmul.f32 %v1171, %v1176
  %v1179 = vadd.f32 %v1166, %v1177
  %v1180 = vadd.f32 %v1167, %v1178
  %1181 = vrot.lane.b32.xlu0 %v642, 123
  %v1182 = vpop.permute.xlu0 %1181
  %1183 = vrot.lane.b32.xlu0 %v646, 123
  %v1184 = vpop.permute.xlu0 %1183
  %v1185 = vld [vmem:[%s3 + $0x2a] sm:$0x1]
  %v1186 = vlaneseq
  %v1187 = vshrl.u32 %v1186, 7
  %v1188 = vsub.s32 0, %v1187
  %v1189 = vrot.slane %v1185, %v1188
  %v1190 = vmul.f32 %v1182, %v1189
  %v1191 = vmul.f32 %v1184, %v1189
  %v1192 = vadd.f32 %v1179, %v1190
  %v1193 = vadd.f32 %v1180, %v1191
  %1194 = vrot.lane.b32.xlu0 %v642, 122
  %v1195 = vpop.permute.xlu0 %1194
  %1196 = vrot.lane.b32.xlu0 %v646, 122
  %v1197 = vpop.permute.xlu0 %1196
  %v1198 = vld [vmem:[%s3 + $0x2b] sm:$0x1]
  %v1199 = vlaneseq
  %v1200 = vshrl.u32 %v1199, 7
  %v1201 = vsub.s32 0, %v1200
  %v1202 = vrot.slane %v1198, %v1201
  %v1203 = vmul.f32 %v1195, %v1202
  %v1204 = vmul.f32 %v1197, %v1202
  %v1205 = vadd.f32 %v1192, %v1203
  %v1206 = vadd.f32 %v1193, %v1204
  %1207 = vrot.lane.b32.xlu0 %v642, 121
  %v1208 = vpop.permute.xlu0 %1207
  %1209 = vrot.lane.b32.xlu0 %v646, 121
  %v1210 = vpop.permute.xlu0 %1209
  %v1211 = vld [vmem:[%s3 + $0x2c] sm:$0x1]
  %v1212 = vlaneseq
  %v1213 = vshrl.u32 %v1212, 7
  %v1214 = vsub.s32 0, %v1213
  %v1215 = vrot.slane %v1211, %v1214
  %v1216 = vmul.f32 %v1208, %v1215
  %v1217 = vmul.f32 %v1210, %v1215
  %v1218 = vadd.f32 %v1205, %v1216
  %v1219 = vadd.f32 %v1206, %v1217
  %v1220 = vmax.f32 %v1218, 0.0
  %v1221 = vmax.f32 %v1219, 0.0
  %1222 = vst [vmem:[%s5] sm:$0xff] %v1220
  %1223 = vst [vmem:[%s5 + $0x8] sm:$0xff] %v1221
  // Predicated region
  $region22: #{basic_block_forward.1} parent=0 // pred_check
    _
  $region23: #{basic_block_forward.1} parent=0 // pred_check_branch
    %1225 = sbr.rel (0) target = $region25
  $region24: #{basic_block_forward.1} parent=0 // pred_region
    _
  $region25: #{basic_block_forward.1} parent=0 // pred_fallthru
    _
  // Predicated region
  $region26: #{basic_block_forward.1} parent=0 // pred_check
    _
  $region27: #{basic_block_forward.1} parent=0 // pred_check_branch
    %1227 = sbr.rel (0) target = $region29
  $region28: #{basic_block_forward.1} parent=0 // pred_region
    _
  $region29: #{basic_block_forward.1} parent=0 // pred_fallthru
    _

</llo_original>
